<compile_context>
chip_gen: v6e
topology: v6e:2x2x1
jax: 0.10.0
libtpu: 0.0.40
codegen_flags: <defaults>
</compile_context>

<pallas_src>
import jax
import jax.numpy as jnp
from jax import lax
from jax.experimental import pallas as pl
from jax.experimental.pallas import tpu as pltpu


def _round_up(x, m):
    return ((x + m - 1) // m) * m


def _nearest_interpolate_nchw(x, size):
    """PyTorch F.interpolate(mode='nearest') on an NCHW tensor."""
    in_h, in_w = x.shape[2], x.shape[3]
    out_h, out_w = size
    idx_h = (jnp.arange(out_h) * in_h) // out_h   # floor(o * in/out)
    idx_w = (jnp.arange(out_w) * in_w) // out_w
    return x[:, :, idx_h[:, None], idx_w[None, :]]


def _separate_loss_kernel(lr_ref, lc_ref, fr_ref, fct_ref, out_ref):
    # out_ref: (1, 8, tn) f32 partial sums for this row block; resident across
    # the (arbitrary) column axis j, so it accumulates all column tiles.
    @pl.when(pl.program_id(1) == 0)
    def _():
        out_ref[...] = jnp.zeros_like(out_ref)

    # (tm, tn) cosine-similarity tile on the MXU.  RHS is pre-transposed in
    # the wrapper to (c_pad, tn), so the contraction ((1,),(0,)) is MXU-native
    # and no per-step XLU transpose of the column tile is generated.
    simi = lax.dot_general(
        fr_ref[...], fct_ref[...],
        dimension_numbers=(((1,), (0,)), ((), ())),
        preferred_element_type=jnp.float32)

    # mask[i, j] = (label_i != label_j); fused as a select (VPU only).
    masked = jnp.where(lr_ref[...] != lc_ref[...], simi, 0.0)

    # VPU-only partial reduction: fold the tm rows into an (8, tn) slab using
    # sublane-aligned static slices + vreg adds.  The 8->1 sublane collapse is
    # deferred to the JAX epilogue, keeping per-step XLU work at zero.
    tm = masked.shape[0]
    partial = masked[0:8, :]
    for s in range(8, tm, 8):
        partial = partial + masked[s:s + 8, :]
    out_ref[...] += partial[None]


def _pick_tiles(n):
    """Row tile tm, wider column tile tn, and padded N divisible by both."""
    n_128 = _round_up(n, 128)
    if n_128 <= 256:
        tm = tn = n_128
    else:
        tm = 256
        # Wide column tile, multiple of 2*tm so the row grid gi is even
        # (both v7x TensorCores get work with "parallel" row semantics).
        tn = min(2048, _round_up(n_128, 2 * tm))
    n_pad = _round_up(n_128, tn)
    return tm, tn, n_pad


def separate_loss(feat, label, size=(64, 64)):
    """JAX/Pallas equivalent of SeparateLoss.forward (feat NCHW, label (B,1,H,W))."""
    feat = _nearest_interpolate_nchw(feat.astype(jnp.float32), size)
    label = _nearest_interpolate_nchw(label.astype(jnp.float32), size)

    b, c, h, w = feat.shape
    n = b * h * w
    feat_flat = jnp.transpose(feat, (0, 2, 3, 1)).reshape(n, c)     # (N, C)
    label_flat = label[:, 0, :, :].reshape(n)                       # (N,)

    # Hoisted L2 normalization (F.normalize p=2, eps=1e-12 semantics): once
    # over (N, C) instead of once per (row-tile, col-tile) pair.
    norms = jnp.sqrt(jnp.sum(feat_flat * feat_flat, axis=1, keepdims=True))
    feat_n = feat_flat / jnp.maximum(norms, 1e-12)

    tm, tn, n_pad = _pick_tiles(n)
    c_pad = _round_up(c, 128)
    gi = n_pad // tm
    gj = n_pad // tn

    # Padding AFTER normalization keeps padded rows/cols all-zero, so they
    # contribute exactly 0 to the masked sum; we divide by the true N^2 below.
    # bf16 MXU inputs with f32 accumulation; drop the bf16 cast if strict f32
    # parity with the PyTorch reference is ever required.
    feat_p = jnp.pad(feat_n, ((0, n_pad - n), (0, c_pad - c))).astype(jnp.bfloat16)
    feat_t = jnp.transpose(feat_p)                                   # (C_pad, N_pad)
    label_p = jnp.pad(label_flat, (0, n_pad - n))
    label_rows = label_p.reshape(n_pad, 1)
    label_cols = label_p.reshape(1, n_pad)

    flops = 2 * n_pad * n_pad * c_pad
    bytes_accessed = (n_pad * c_pad * 2            # row feature tiles (read once)
                      + gi * n_pad * c_pad * 2     # column tiles re-read per row block
                      + gi * 8 * tn * 4            # per-row-block partial outputs
                      + 2 * n_pad * 4)             # labels

    partials = pl.pallas_call(
        _separate_loss_kernel,
        out_shape=jax.ShapeDtypeStruct((gi, 8, tn), jnp.float32),
        grid_spec=pltpu.PrefetchScalarGridSpec(
            num_scalar_prefetch=0,
            grid=(gi, gj),
            in_specs=[
                pl.BlockSpec((tm, 1), lambda i, j: (i, 0)),        # label rows
                pl.BlockSpec((1, tn), lambda i, j: (0, j)),        # label cols
                pl.BlockSpec((tm, c_pad), lambda i, j: (i, 0)),    # feat rows (bf16)
                pl.BlockSpec((c_pad, tn), lambda i, j: (0, j)),    # feat cols^T (bf16)
            ],
            out_specs=pl.BlockSpec((1, 8, tn), lambda i, j: (i, 0, 0)),
        ),
        compiler_params=pltpu.CompilerParams(
            # Row axis independent (megacore-shardable); column axis carries
            # the resident accumulator.
            # TODO(synk): on v7x, if profiling shows only one busy TensorCore,
            # switch the row axis to pltpu.CORE_PARALLEL.
            dimension_semantics=("parallel", "arbitrary"),
            vmem_limit_bytes=32 * 1024 * 1024),
        cost_estimate=pl.CostEstimate(
            flops=flops, transcendentals=0, bytes_accessed=bytes_accessed),
    )(label_rows, label_cols, feat_p, feat_t)

    # TODO(synk): if labels are known-discrete with small cardinality K, the
    # whole N^2 loop can be replaced by the class-sum identity
    #   sum_{l_i != l_j} f_i.f_j = ||sum_i f_i||^2 - sum_k ||sum_{l_i=k} f_i||^2
    # (an O(N*C*K) one-hot matmul); kept the general kernel to match the module.
    return jnp.sum(partials) / jnp.float32(n * n)


def _reference_separate_loss(feat, label, size):
    feat = _nearest_interpolate_nchw(feat.astype(jnp.float32), size)
    label = _nearest_interpolate_nchw(label.astype(jnp.float32), size)
    b, c, h, w = feat.shape
    n = b * h * w
    f = jnp.transpose(feat, (0, 2, 3, 1)).reshape(n, c)
    l = label[:, 0, :, :].reshape(n)
    f = f / jnp.maximum(jnp.sqrt(jnp.sum(f * f, axis=1, keepdims=True)), 1e-12)
    simi = f @ f.T
    mask = (l[:, None] != l[None, :]).astype(jnp.float32)
    return jnp.mean(mask * simi)


if __name__ == "__main__":
    key = jax.random.PRNGKey(0)
    k_feat, k_label = jax.random.split(key)

    # Small shapes: batch=2, channels=4, spatial 7x9, resized to 16x16
    # -> N = 2*16*16 = 512 (gives a 2x1 grid with tm=256, tn=512).
    feat = jax.random.normal(k_feat, (2, 4, 7, 9), dtype=jnp.float32)
    label = jax.random.randint(k_label, (2, 1, 7, 9), 0, 2).astype(jnp.float32)
    size = (16, 16)

    loss = separate_loss(feat, label, size=size)
    jax.block_until_ready(loss)

    ref = _reference_separate_loss(feat, label, size)
    # bf16 matmul inputs (f32 accumulation) -> slightly looser tolerance than f32.
    assert jnp.allclose(loss, ref, atol=1e-3, rtol=1e-2), (loss, ref)

    print("KERNEL_OK")
</pallas_src>

<mosaic_0001>
module attributes {stable_mosaic.version = 11 : i64} {
  func.func @_separate_loss_kernel(%arg0: i32, %arg1: i32, %arg2: memref<256x1xf32, #tpu.memory_space<vmem>>, %arg3: memref<1x512xf32, #tpu.memory_space<vmem>>, %arg4: memref<256x128xbf16, #tpu.memory_space<vmem>>, %arg5: memref<128x512xbf16, #tpu.memory_space<vmem>>, %arg6: memref<1x8x512xf32, #tpu.memory_space<vmem>>) attributes {dimension_semantics = [#tpu.dimension_semantics<parallel>, #tpu.dimension_semantics<arbitrary>], iteration_bounds = array<i64: 2, 1>, scalar_prefetch = 0 : i64, scratch_operands = 0 : i64, tpu.core_type = #tpu.core_type<tc>, window_params = [{transform_indices = @transform_0, window_bounds = array<i64: 256, 1>}, {transform_indices = @transform_1, window_bounds = array<i64: 1, 512>}, {transform_indices = @transform_2, window_bounds = array<i64: 256, 128>}, {transform_indices = @transform_3, window_bounds = array<i64: 128, 512>}, {transform_indices = @transform_4, window_bounds = array<i64: 1, 8, 512>}]} {
    %c0_i32 = arith.constant 0 : i32
    %0 = arith.cmpi eq, %arg1, %c0_i32 : i32
    %1 = arith.extui %0 : i1 to i32
    %c0_i32_0 = arith.constant 0 : i32
    %2 = arith.cmpi ne, %1, %c0_i32_0 : i32
    scf.if %2 {
      %cst_15 = arith.constant 0.000000e+00 : f32
      %80 = vector.broadcast %cst_15 : f32 to vector<1x8x512xf32>
      %c0_16 = arith.constant 0 : index
      %c0_17 = arith.constant 0 : index
      %c0_18 = arith.constant 0 : index
      %81 = vector.load %arg6[%c0_16, %c0_17, %c0_18] : memref<1x8x512xf32, #tpu.memory_space<vmem>>, vector<1x8x512xf32>
      tpu.vector_store %arg6[%c0_16, %c0_17, %c0_18], %80 {strides = array<i32>} : memref<1x8x512xf32, #tpu.memory_space<vmem>>, vector<1x8x512xf32>,
    } else {
    }
    %c0 = arith.constant 0 : index
    %c0_1 = arith.constant 0 : index
    %3 = vector.load %arg4[%c0, %c0_1] : memref<256x128xbf16, #tpu.memory_space<vmem>>, vector<256x128xbf16>
    %c0_2 = arith.constant 0 : index
    %c0_3 = arith.constant 0 : index
    %4 = vector.load %arg5[%c0_2, %c0_3] : memref<128x512xbf16, #tpu.memory_space<vmem>>, vector<128x512xbf16>
    %cst = arith.constant dense<0.000000e+00> : vector<256x512xf32>
    %5 = tpu.matmul %3, %4, %cst {dimension_numbers = #tpu.dot_dimension_numbers<[1], [0], [0], [1], [0, 0, 1, 1], [], []>} : vector<256x128xbf16>, vector<128x512xbf16>, vector<256x512xf32> -> vector<256x512xf32>
    %c0_4 = arith.constant 0 : index
    %c0_5 = arith.constant 0 : index
    %6 = vector.load %arg2[%c0_4, %c0_5] : memref<256x1xf32, #tpu.memory_space<vmem>>, vector<256x1xf32>
    %c0_6 = arith.constant 0 : index
    %c0_7 = arith.constant 0 : index
    %7 = vector.load %arg3[%c0_6, %c0_7] : memref<1x512xf32, #tpu.memory_space<vmem>>, vector<1x512xf32>
    %8 = vector.broadcast %6 : vector<256x1xf32> to vector<256x512xf32>
    %9 = vector.broadcast %7 : vector<1x512xf32> to vector<256x512xf32>
    %10 = arith.cmpf one, %8, %9 : vector<256x512xf32>
    %cst_8 = arith.constant 0.000000e+00 : f32
    %11 = vector.broadcast %cst_8 : f32 to vector<256x512xf32>
    %12 = arith.select %10, %5, %11 : vector<256x512xi1>, vector<256x512xf32>
    %13 = vector.extract_strided_slice %12 {offsets = [0, 0], sizes = [8, 512], strides = [1, 1]} : vector<256x512xf32> to vector<8x512xf32>
    %14 = vector.extract_strided_slice %12 {offsets = [8, 0], sizes = [8, 512], strides = [1, 1]} : vector<256x512xf32> to vector<8x512xf32>
    %15 = arith.addf %13, %14 : vector<8x512xf32>
    %16 = vector.extract_strided_slice %12 {offsets = [16, 0], sizes = [8, 512], strides = [1, 1]} : vector<256x512xf32> to vector<8x512xf32>
    %17 = arith.addf %15, %16 : vector<8x512xf32>
    %18 = vector.extract_strided_slice %12 {offsets = [24, 0], sizes = [8, 512], strides = [1, 1]} : vector<256x512xf32> to vector<8x512xf32>
    %19 = arith.addf %17, %18 : vector<8x512xf32>
    %20 = vector.extract_strided_slice %12 {offsets = [32, 0], sizes = [8, 512], strides = [1, 1]} : vector<256x512xf32> to vector<8x512xf32>
    %21 = arith.addf %19, %20 : vector<8x512xf32>
    %22 = vector.extract_strided_slice %12 {offsets = [40, 0], sizes = [8, 512], strides = [1, 1]} : vector<256x512xf32> to vector<8x512xf32>
    %23 = arith.addf %21, %22 : vector<8x512xf32>
    %24 = vector.extract_strided_slice %12 {offsets = [48, 0], sizes = [8, 512], strides = [1, 1]} : vector<256x512xf32> to vector<8x512xf32>
    %25 = arith.addf %23, %24 : vector<8x512xf32>
    %26 = vector.extract_strided_slice %12 {offsets = [56, 0], sizes = [8, 512], strides = [1, 1]} : vector<256x512xf32> to vector<8x512xf32>
    %27 = arith.addf %25, %26 : vector<8x512xf32>
    %28 = vector.extract_strided_slice %12 {offsets = [64, 0], sizes = [8, 512], strides = [1, 1]} : vector<256x512xf32> to vector<8x512xf32>
    %29 = arith.addf %27, %28 : vector<8x512xf32>
    %30 = vector.extract_strided_slice %12 {offsets = [72, 0], sizes = [8, 512], strides = [1, 1]} : vector<256x512xf32> to vector<8x512xf32>
    %31 = arith.addf %29, %30 : vector<8x512xf32>
    %32 = vector.extract_strided_slice %12 {offsets = [80, 0], sizes = [8, 512], strides = [1, 1]} : vector<256x512xf32> to vector<8x512xf32>
    %33 = arith.addf %31, %32 : vector<8x512xf32>
    %34 = vector.extract_strided_slice %12 {offsets = [88, 0], sizes = [8, 512], strides = [1, 1]} : vector<256x512xf32> to vector<8x512xf32>
    %35 = arith.addf %33, %34 : vector<8x512xf32>
    %36 = vector.extract_strided_slice %12 {offsets = [96, 0], sizes = [8, 512], strides = [1, 1]} : vector<256x512xf32> to vector<8x512xf32>
    %37 = arith.addf %35, %36 : vector<8x512xf32>
    %38 = vector.extract_strided_slice %12 {offsets = [104, 0], sizes = [8, 512], strides = [1, 1]} : vector<256x512xf32> to vector<8x512xf32>
    %39 = arith.addf %37, %38 : vector<8x512xf32>
    %40 = vector.extract_strided_slice %12 {offsets = [112, 0], sizes = [8, 512], strides = [1, 1]} : vector<256x512xf32> to vector<8x512xf32>
    %41 = arith.addf %39, %40 : vector<8x512xf32>
    %42 = vector.extract_strided_slice %12 {offsets = [120, 0], sizes = [8, 512], strides = [1, 1]} : vector<256x512xf32> to vector<8x512xf32>
    %43 = arith.addf %41, %42 : vector<8x512xf32>
    %44 = vector.extract_strided_slice %12 {offsets = [128, 0], sizes = [8, 512], strides = [1, 1]} : vector<256x512xf32> to vector<8x512xf32>
    %45 = arith.addf %43, %44 : vector<8x512xf32>
    %46 = vector.extract_strided_slice %12 {offsets = [136, 0], sizes = [8, 512], strides = [1, 1]} : vector<256x512xf32> to vector<8x512xf32>
    %47 = arith.addf %45, %46 : vector<8x512xf32>
    %48 = vector.extract_strided_slice %12 {offsets = [144, 0], sizes = [8, 512], strides = [1, 1]} : vector<256x512xf32> to vector<8x512xf32>
    %49 = arith.addf %47, %48 : vector<8x512xf32>
    %50 = vector.extract_strided_slice %12 {offsets = [152, 0], sizes = [8, 512], strides = [1, 1]} : vector<256x512xf32> to vector<8x512xf32>
    %51 = arith.addf %49, %50 : vector<8x512xf32>
    %52 = vector.extract_strided_slice %12 {offsets = [160, 0], sizes = [8, 512], strides = [1, 1]} : vector<256x512xf32> to vector<8x512xf32>
    %53 = arith.addf %51, %52 : vector<8x512xf32>
    %54 = vector.extract_strided_slice %12 {offsets = [168, 0], sizes = [8, 512], strides = [1, 1]} : vector<256x512xf32> to vector<8x512xf32>
    %55 = arith.addf %53, %54 : vector<8x512xf32>
    %56 = vector.extract_strided_slice %12 {offsets = [176, 0], sizes = [8, 512], strides = [1, 1]} : vector<256x512xf32> to vector<8x512xf32>
    %57 = arith.addf %55, %56 : vector<8x512xf32>
    %58 = vector.extract_strided_slice %12 {offsets = [184, 0], sizes = [8, 512], strides = [1, 1]} : vector<256x512xf32> to vector<8x512xf32>
    %59 = arith.addf %57, %58 : vector<8x512xf32>
    %60 = vector.extract_strided_slice %12 {offsets = [192, 0], sizes = [8, 512], strides = [1, 1]} : vector<256x512xf32> to vector<8x512xf32>
    %61 = arith.addf %59, %60 : vector<8x512xf32>
    %62 = vector.extract_strided_slice %12 {offsets = [200, 0], sizes = [8, 512], strides = [1, 1]} : vector<256x512xf32> to vector<8x512xf32>
    %63 = arith.addf %61, %62 : vector<8x512xf32>
    %64 = vector.extract_strided_slice %12 {offsets = [208, 0], sizes = [8, 512], strides = [1, 1]} : vector<256x512xf32> to vector<8x512xf32>
    %65 = arith.addf %63, %64 : vector<8x512xf32>
    %66 = vector.extract_strided_slice %12 {offsets = [216, 0], sizes = [8, 512], strides = [1, 1]} : vector<256x512xf32> to vector<8x512xf32>
    %67 = arith.addf %65, %66 : vector<8x512xf32>
    %68 = vector.extract_strided_slice %12 {offsets = [224, 0], sizes = [8, 512], strides = [1, 1]} : vector<256x512xf32> to vector<8x512xf32>
    %69 = arith.addf %67, %68 : vector<8x512xf32>
    %70 = vector.extract_strided_slice %12 {offsets = [232, 0], sizes = [8, 512], strides = [1, 1]} : vector<256x512xf32> to vector<8x512xf32>
    %71 = arith.addf %69, %70 : vector<8x512xf32>
    %72 = vector.extract_strided_slice %12 {offsets = [240, 0], sizes = [8, 512], strides = [1, 1]} : vector<256x512xf32> to vector<8x512xf32>
    %73 = arith.addf %71, %72 : vector<8x512xf32>
    %74 = vector.extract_strided_slice %12 {offsets = [248, 0], sizes = [8, 512], strides = [1, 1]} : vector<256x512xf32> to vector<8x512xf32>
    %75 = arith.addf %73, %74 : vector<8x512xf32>
    %c0_9 = arith.constant 0 : index
    %c0_10 = arith.constant 0 : index
    %c0_11 = arith.constant 0 : index
    %76 = vector.load %arg6[%c0_9, %c0_10, %c0_11] : memref<1x8x512xf32, #tpu.memory_space<vmem>>, vector<1x8x512xf32>
    %77 = vector.shape_cast %75 : vector<8x512xf32> to vector<1x8x512xf32>
    %78 = arith.addf %76, %77 : vector<1x8x512xf32>
    %c0_12 = arith.constant 0 : index
    %c0_13 = arith.constant 0 : index
    %c0_14 = arith.constant 0 : index
    %79 = vector.load %arg6[%c0_12, %c0_13, %c0_14] : memref<1x8x512xf32, #tpu.memory_space<vmem>>, vector<1x8x512xf32>
    tpu.vector_store %arg6[%c0_12, %c0_13, %c0_14], %78 {strides = array<i32>} : memref<1x8x512xf32, #tpu.memory_space<vmem>>, vector<1x8x512xf32>,
    return
  }
  func.func @transform_0(%arg0: i32, %arg1: i32) -> (i32, i32) {
    %c0_i32 = arith.constant 0 : i32
    %c0_i32_0 = arith.constant 0 : i32
    return %arg0, %c0_i32 : i32, i32
  }
  func.func @transform_1(%arg0: i32, %arg1: i32) -> (i32, i32) {
    %c0_i32 = arith.constant 0 : i32
    %c0_i32_0 = arith.constant 0 : i32
    return %c0_i32, %arg1 : i32, i32
  }
  func.func @transform_2(%arg0: i32, %arg1: i32) -> (i32, i32) {
    %c0_i32 = arith.constant 0 : i32
    %c0_i32_0 = arith.constant 0 : i32
    return %arg0, %c0_i32 : i32, i32
  }
  func.func @transform_3(%arg0: i32, %arg1: i32) -> (i32, i32) {
    %c0_i32 = arith.constant 0 : i32
    %c0_i32_0 = arith.constant 0 : i32
    return %c0_i32, %arg1 : i32, i32
  }
  func.func @transform_4(%arg0: i32, %arg1: i32) -> (i32, i32, i32) {
    %c0_i32 = arith.constant 0 : i32
    %c0_i32_0 = arith.constant 0 : i32
    %c0_i32_1 = arith.constant 0 : i32
    return %arg0, %c0_i32, %c0_i32_0 : i32, i32, i32
  }
}

</mosaic_0001>

<llo_original>
// kernel: tpu_custom_call.1
$region0: #{tpu_custom_call.1}
  #allocation0 [shape = 'u32[]', space=smem, size = 0x4, offset = 0x4, fixed_abs, tag = 'smem constant byte address 0x4 - core index']
  #allocation1 [shape = 'u32[144,128]{1,0:T(1,128)}', space=vmem, size = 0x12000, scoped, tag = 'internal scratch']
  %s0 = inlined_call_operand.vmem [shape: f32[512,1], index: 0, kind: input, shape index: {}]
  %s1 = inlined_call_operand.vmem [shape: f32[1,512], index: 1, kind: input, shape index: {}]
  %s2 = inlined_call_operand.vmem [shape: bf16[512,128], index: 2, kind: input, shape index: {}]
  %s3 = inlined_call_operand.vmem [shape: bf16[128,512], index: 3, kind: input, shape index: {}]
  %s4 = inlined_call_operand.hbm [shape: f32[2,8,512], index: 4, kind: output, shape index: {}]
  %s5 = sld [smem:[#allocation0]]
  $region53: #{tpu_custom_call.1} parent=0
    _
  %s7 = ssub.s32 1, %s5
  %s8 = scalar_select 0, %s7, %s5
  $region1: #{tpu_custom_call.1} parent=0
    #allocation2 [shape = 'u8[32768]{0}', space=vmem, size = 0x8000, scoped, tag = 'output window, operand 0']
    #allocation3 [shape = 's32[2]{0}', space=sflag, size = 0x8, scoped, tag = 'scoped memory for tpu_custom_call.1']
    %9 = vsyncpa [#allocation3], 0
    %s10 = scalar_lea.sflag [#allocation3], 1
    %11 = vsyncpa %s10, 0
    loop: start=0, step=1, limit=4
    $region2: #{tpu_custom_call.1} parent=1 // loop_pre_header
      _
    $region3: #{tpu_custom_call.1} parent=1 // loop_header
      %s13 = sphi 0, %s17
      %p14 = scmp.ge.s32.totalorder %s13, 4
      %s20 = sphi 0, %s32
      %s21 = sphi 0, %s28
      %s22 = sphi 0, %s20
      %s23 = sphi 0, %s21
      %s24 = sphi 0, %s22
      %s25 = sphi 0, %s23
      %s35 = sphi 0, %s37
      %s38 = sphi 0, %s35
      %s39 = sphi 0, %s38
      %s55 = sphi 0, %s39
      %s61 = sphi 0, %s63
      %s64 = sphi 0, %s61
      %s65 = sphi 0, %s64
      %s81 = sphi 0, %s65
      %s87 = sphi 0, %s89
      %s90 = sphi 0, %s87
      %s91 = sphi 0, %s90
      %s107 = sphi 0, %s91
      %s113 = sphi 0, %s115
      %s116 = sphi 0, %s113
      %s117 = sphi 0, %s116
      %s133 = sphi 0, %s117
      %s139 = sphi 0, %s141
      %s142 = sphi 0, %s139
      %s143 = sphi 0, %s142
      %s159 = sphi 0, %s143
    $region4: #{tpu_custom_call.1} parent=1 // loop_header_branch
      %16 = sbr.rel (%p14) target = $region8
    $region5: #{tpu_custom_call.1} parent=1 // loop_body
      %s18 = ssub.s32 %s13, 1
      %s19 = ssub.s32 %s13, 2
      %s26 = sadd.s32 1, %s21
      %p27 = scmp.ge.s32.totalorder %s26, 1
      %s28 = scalar_select %p27, 0, %s26
      %s29 = sadd.s32 1, %s20
      %s30 = scalar_select %p27, %s29, %s20
      %p31 = scmp.ge.s32.totalorder %s30, 2
      %s32 = scalar_select %p31, 0, %s30
      %s33 = ssub.s32 %s20, %s32
      %p34 = scmp.eq.s32.totalorder %s33, 0
      %s36 = sadd.s32 %s35, 1
      %s37 = scalar_select %p34, %s35, %s36
      %p40 = pneg %p34
      %p41 = scmp.eq.s32.totalorder %s13, 1
      %p42 = por %p40, %p41
      %p43 = scmp.ne.s32.totalorder %s35, %s38
      %p44 = scmp.eq.s32.totalorder %s13, 0
      %p45 = por %p43, %p44
      %p46 = scmp.ne.s32.totalorder %s35, %s38
      %p47 = scmp.eq.s32.totalorder %s18, 1
      %p48 = por %p46, %p47
      %p49 = scmp.ne.s32.totalorder %s38, %s39
      %p50 = scmp.eq.s32.totalorder %s18, 0
      %p51 = por %p49, %p50
      %p52 = scmp.ne.s32.totalorder %s38, %s39
      %p53 = scmp.eq.s32.totalorder %s19, 1
      %p54 = por %p52, %p53
      %p56 = scmp.ne.s32.totalorder %s39, %s55
      %p57 = scmp.eq.s32.totalorder %s19, 0
      %p58 = por %p56, %p57
      %s59 = ssub.s32 %s21, %s28
      %p60 = scmp.eq.s32.totalorder %s59, 0
      %s62 = sadd.s32 %s61, 1
      %s63 = scalar_select %p60, %s61, %s62
      %p66 = pneg %p60
      %p67 = scmp.eq.s32.totalorder %s13, 1
      %p68 = por %p66, %p67
      %p69 = scmp.ne.s32.totalorder %s61, %s64
      %p70 = scmp.eq.s32.totalorder %s13, 0
      %p71 = por %p69, %p70
      %p72 = scmp.ne.s32.totalorder %s61, %s64
      %p73 = scmp.eq.s32.totalorder %s18, 1
      %p74 = por %p72, %p73
      %p75 = scmp.ne.s32.totalorder %s64, %s65
      %p76 = scmp.eq.s32.totalorder %s18, 0
      %p77 = por %p75, %p76
      %p78 = scmp.ne.s32.totalorder %s64, %s65
      %p79 = scmp.eq.s32.totalorder %s19, 1
      %p80 = por %p78, %p79
      %p82 = scmp.ne.s32.totalorder %s65, %s81
      %p83 = scmp.eq.s32.totalorder %s19, 0
      %p84 = por %p82, %p83
      %s85 = ssub.s32 %s20, %s32
      %p86 = scmp.eq.s32.totalorder %s85, 0
      %s88 = sadd.s32 %s87, 1
      %s89 = scalar_select %p86, %s87, %s88
      %p92 = pneg %p86
      %p93 = scmp.eq.s32.totalorder %s13, 1
      %p94 = por %p92, %p93
      %p95 = scmp.ne.s32.totalorder %s87, %s90
      %p96 = scmp.eq.s32.totalorder %s13, 0
      %p97 = por %p95, %p96
      %p98 = scmp.ne.s32.totalorder %s87, %s90
      %p99 = scmp.eq.s32.totalorder %s18, 1
      %p100 = por %p98, %p99
      %p101 = scmp.ne.s32.totalorder %s90, %s91
      %p102 = scmp.eq.s32.totalorder %s18, 0
      %p103 = por %p101, %p102
      %p104 = scmp.ne.s32.totalorder %s90, %s91
      %p105 = scmp.eq.s32.totalorder %s19, 1
      %p106 = por %p104, %p105
      %p108 = scmp.ne.s32.totalorder %s91, %s107
      %p109 = scmp.eq.s32.totalorder %s19, 0
      %p110 = por %p108, %p109
      %s111 = ssub.s32 %s21, %s28
      %p112 = scmp.eq.s32.totalorder %s111, 0
      %s114 = sadd.s32 %s113, 1
      %s115 = scalar_select %p112, %s113, %s114
      %p118 = pneg %p112
      %p119 = scmp.eq.s32.totalorder %s13, 1
      %p120 = por %p118, %p119
      %p121 = scmp.ne.s32.totalorder %s113, %s116
      %p122 = scmp.eq.s32.totalorder %s13, 0
      %p123 = por %p121, %p122
      %p124 = scmp.ne.s32.totalorder %s113, %s116
      %p125 = scmp.eq.s32.totalorder %s18, 1
      %p126 = por %p124, %p125
      %p127 = scmp.ne.s32.totalorder %s116, %s117
      %p128 = scmp.eq.s32.totalorder %s18, 0
      %p129 = por %p127, %p128
      %p130 = scmp.ne.s32.totalorder %s116, %s117
      %p131 = scmp.eq.s32.totalorder %s19, 1
      %p132 = por %p130, %p131
      %p134 = scmp.ne.s32.totalorder %s117, %s133
      %p135 = scmp.eq.s32.totalorder %s19, 0
      %p136 = por %p134, %p135
      %s137 = ssub.s32 %s20, %s32
      %p138 = scmp.eq.s32.totalorder %s137, 0
      %s140 = sadd.s32 %s139, 1
      %s141 = scalar_select %p138, %s139, %s140
      %p144 = pneg %p138
      %p145 = scmp.eq.s32.totalorder %s13, 1
      %p146 = por %p144, %p145
      %p147 = scmp.ne.s32.totalorder %s139, %s142
      %p148 = scmp.eq.s32.totalorder %s13, 0
      %p149 = por %p147, %p148
      %p150 = scmp.ne.s32.totalorder %s139, %s142
      %p151 = scmp.eq.s32.totalorder %s18, 1
      %p152 = por %p150, %p151
      %p153 = scmp.ne.s32.totalorder %s142, %s143
      %p154 = scmp.eq.s32.totalorder %s18, 0
      %p155 = por %p153, %p154
      %p156 = scmp.ne.s32.totalorder %s142, %s143
      %p157 = scmp.eq.s32.totalorder %s19, 1
      %p158 = por %p156, %p157
      %p160 = scmp.ne.s32.totalorder %s143, %s159
      %p161 = scmp.eq.s32.totalorder %s19, 0
      %p162 = por %p160, %p161
      %p163 = scmp.le.s32.totalorder 1, %s13
      %p164 = scmp.lt.s32.totalorder %s13, 3
      %p165 = pnand %p163, %p164
      %p166 = pneg %p165
      // Predicated region
      $region9: #{tpu_custom_call.1} parent=5 // pred_check
        _
      $region10: #{tpu_custom_call.1} parent=5 // pred_check_branch
        %168 = sbr.rel (%p165) target = $region12
      $region11: #{tpu_custom_call.1} parent=5 // pred_region
        %s169 = ssub.s32 %s13, 1
        // Predicated region
        $region13: #{tpu_custom_call.1} parent=11 // pred_check
          %p170 = pneg %p77
        $region14: #{tpu_custom_call.1} parent=11 // pred_check_branch
          %172 = sbr.rel (%p170) target = $region16
        $region15: #{tpu_custom_call.1} parent=11 // pred_region
          %s173 = smul.u32 4, %s23
          %p174 = scmp.lt.s32.totalorder %s173, 3
          %s175 = scalar_select %p174, %s173, 3
          %s176 = scalar_lea.vmem %s1, %s175
          %s177 = smul.u32 4, %s23
        $region16: #{tpu_custom_call.1} parent=11 // pred_fallthru
          _
        // Predicated region
        $region17: #{tpu_custom_call.1} parent=11 // pred_check
          %p178 = pneg %p129
        $region18: #{tpu_custom_call.1} parent=11 // pred_check_branch
          %180 = sbr.rel (%p178) target = $region20
        $region19: #{tpu_custom_call.1} parent=11 // pred_region
          %s181 = smul.u32 4, %s23
          %p182 = scmp.lt.s32.totalorder %s181, 3
          %s183 = scalar_select %p182, %s181, 3
          %s184 = smul.addr %s183, 4
          %s185 = scalar_lea.vmem %s3, %s184
          %s186 = smul.u32 4, %s23
        $region20: #{tpu_custom_call.1} parent=11 // pred_fallthru
          _
      $region12: #{tpu_custom_call.1} parent=5 // pred_fallthru
        _
      %p187 = scmp.lt.s32.totalorder %s13, 2
      // Predicated region
      $region21: #{tpu_custom_call.1} parent=5 // pred_check
        %p188 = pneg %p187
      $region22: #{tpu_custom_call.1} parent=5 // pred_check_branch
        %190 = sbr.rel (%p188) target = $region24
      $region23: #{tpu_custom_call.1} parent=5 // pred_region
        // Predicated region
        $region25: #{tpu_custom_call.1} parent=23 // pred_check
          %p191 = pneg %p45
        $region26: #{tpu_custom_call.1} parent=23 // pred_check_branch
          %193 = sbr.rel (%p191) target = $region28
        $region27: #{tpu_custom_call.1} parent=23 // pred_region
          %s194 = smul.u32 32, %s20
          %p195 = scmp.lt.s32.totalorder %s194, 63
          %s196 = scalar_select %p195, %s194, 63
          %s197 = smul.addr %s196, 8
          %s198 = scalar_lea.vmem %s0, %s197
          %s199 = smul.u32 32, %s20
        $region28: #{tpu_custom_call.1} parent=23 // pred_fallthru
          _
        // Predicated region
        $region29: #{tpu_custom_call.1} parent=23 // pred_check
          %p200 = pneg %p97
        $region30: #{tpu_custom_call.1} parent=23 // pred_check_branch
          %202 = sbr.rel (%p200) target = $region32
        $region31: #{tpu_custom_call.1} parent=23 // pred_region
          %s203 = smul.u32 32, %s20
          %p204 = scmp.lt.s32.totalorder %s203, 63
          %s205 = scalar_select %p204, %s203, 63
          %s206 = smul.addr %s205, 4
          %s207 = scalar_lea.vmem %s2, %s206
          %s208 = smul.u32 32, %s20
        $region32: #{tpu_custom_call.1} parent=23 // pred_fallthru
          _
      $region24: #{tpu_custom_call.1} parent=5 // pred_fallthru
        _
      %p209 = scmp.le.s32.totalorder 1, %s13
      %p210 = scmp.lt.s32.totalorder %s13, 3
      %p211 = pnand %p209, %p210
      %p212 = pneg %p211
      // Predicated region
      $region33: #{tpu_custom_call.1} parent=5 // pred_check
        _
      $region34: #{tpu_custom_call.1} parent=5 // pred_check_branch
        %214 = sbr.rel (%p211) target = $region36
      $region35: #{tpu_custom_call.1} parent=5 // pred_region
        %s215 = ssub.s32 %s13, 1
        %s216 = smul.u32 32, %s22
        %p217 = scmp.lt.s32.totalorder %s216, 63
        %s218 = scalar_select %p217, %s216, 63
        %s219 = smul.addr %s218, 8
        %s220 = scalar_lea.vmem %s0, %s219
        %p221 = pneg %p51
        %p222 = pneg %p48
        %s223 = smul.u32 4, %s23
        %p224 = scmp.lt.s32.totalorder %s223, 3
        %s225 = scalar_select %p224, %s223, 3
        %s226 = scalar_lea.vmem %s1, %s225
        %p227 = pneg %p77
        %p228 = pneg %p74
        %s229 = smul.u32 32, %s22
        %p230 = scmp.lt.s32.totalorder %s229, 63
        %s231 = scalar_select %p230, %s229, 63
        %s232 = smul.addr %s231, 4
        %s233 = scalar_lea.vmem %s2, %s232
        %p234 = pneg %p103
        %p235 = pneg %p100
        %s236 = smul.u32 4, %s23
        %p237 = scmp.lt.s32.totalorder %s236, 3
        %s238 = scalar_select %p237, %s236, 3
        %s239 = smul.addr %s238, 4
        %s240 = scalar_lea.vmem %s3, %s239
        %p241 = pneg %p129
        %p242 = pneg %p126
        %p243 = pneg %p155
        %p244 = pneg %p152
        %s245 = sand.u32 %s142, 1
        %s246 = scalar_lea.sflag [#allocation3], %s245
        %s247 = sand.u32 %s142, 1
        %s248 = smul.addr %s247, 32
        %s249 = scalar_lea.vmem [#allocation2], %s248
        %s250 = smul.u32 32, %s22
        %p251 = scmp.lt.s32.totalorder %s250, 63
        %s252 = scalar_select %p251, %s250, 63
        %s253 = smul.addr %s252, 8
        %s254 = scalar_lea.vmem %s0, %s253
        %s255 = smul.u32 32, %s22
        %s256 = smul.u32 4, %s23
        %p257 = scmp.lt.s32.totalorder %s256, 3
        %s258 = scalar_select %p257, %s256, 3
        %s259 = scalar_lea.vmem %s1, %s258
        %s260 = smul.u32 4, %s23
        %s261 = smul.u32 32, %s22
        %p262 = scmp.lt.s32.totalorder %s261, 63
        %s263 = scalar_select %p262, %s261, 63
        %s264 = smul.addr %s263, 4
        %s265 = scalar_lea.vmem %s2, %s264
        %s266 = smul.u32 32, %s22
        %s267 = smul.u32 4, %s23
        %p268 = scmp.lt.s32.totalorder %s267, 3
        %s269 = scalar_select %p268, %s267, 3
        %s270 = smul.addr %s269, 4
        %s271 = scalar_lea.vmem %s3, %s270
        %s272 = smul.u32 4, %s23
        %p274 = scmp.eq.s32.totalorder %s23, 0
        // Predicated region
        $region37: #{tpu_custom_call.1} parent=35 // pred_check
          %p275 = pneg %p274
        $region38: #{tpu_custom_call.1} parent=35 // pred_check_branch
          %277 = sbr.rel (%p275) target = $region40
        $region39: #{tpu_custom_call.1} parent=35 // pred_region
          %278 = vst [vmem:[%s249] sm:$0xff] 0.0
          %279 = vst [vmem:[%s249 + $0x8] sm:$0xff] 0.0
          %280 = vst [vmem:[%s249 + $0x10] sm:$0xff] 0.0
          %281 = vst [vmem:[%s249 + $0x18] sm:$0xff] 0.0
        $region40: #{tpu_custom_call.1} parent=35 // pred_fallthru
          _
        %v282 = vld [vmem:[%s265] sm:$0xf]
        %v283 = vld [vmem:[%s265 + $0x4] sm:$0xf]
        %v284 = vld [vmem:[%s265 + $0x8] sm:$0xf]
        %v285 = vld [vmem:[%s265 + $0xc] sm:$0xf]
        %v286 = vld [vmem:[%s265 + $0x10] sm:$0xf]
        %v287 = vld [vmem:[%s265 + $0x14] sm:$0xf]
        %v288 = vld [vmem:[%s265 + $0x18] sm:$0xf]
        %v289 = vld [vmem:[%s265 + $0x1c] sm:$0xf]
        %v290 = vld [vmem:[%s265 + $0x20] sm:$0xf]
        %v291 = vld [vmem:[%s265 + $0x24] sm:$0xf]
        %v292 = vld [vmem:[%s265 + $0x28] sm:$0xf]
        %v293 = vld [vmem:[%s265 + $0x2c] sm:$0xf]
        %v294 = vld [vmem:[%s265 + $0x30] sm:$0xf]
        %v295 = vld [vmem:[%s265 + $0x34] sm:$0xf]
        %v296 = vld [vmem:[%s265 + $0x38] sm:$0xf]
        %v297 = vld [vmem:[%s265 + $0x3c] sm:$0xf]
        %v298 = vld [vmem:[%s265 + $0x40] sm:$0xf]
        %v299 = vld [vmem:[%s265 + $0x44] sm:$0xf]
        %v300 = vld [vmem:[%s265 + $0x48] sm:$0xf]
        %v301 = vld [vmem:[%s265 + $0x4c] sm:$0xf]
        %v302 = vld [vmem:[%s265 + $0x50] sm:$0xf]
        %v303 = vld [vmem:[%s265 + $0x54] sm:$0xf]
        %v304 = vld [vmem:[%s265 + $0x58] sm:$0xf]
        %v305 = vld [vmem:[%s265 + $0x5c] sm:$0xf]
        %v306 = vld [vmem:[%s265 + $0x60] sm:$0xf]
        %v307 = vld [vmem:[%s265 + $0x64] sm:$0xf]
        %v308 = vld [vmem:[%s265 + $0x68] sm:$0xf]
        %v309 = vld [vmem:[%s265 + $0x6c] sm:$0xf]
        %v310 = vld [vmem:[%s265 + $0x70] sm:$0xf]
        %v311 = vld [vmem:[%s265 + $0x74] sm:$0xf]
        %v312 = vld [vmem:[%s265 + $0x78] sm:$0xf]
        %v313 = vld [vmem:[%s265 + $0x7c] sm:$0xf]
        %v314 = vld [vmem:[%s271] sm:$0xff]
        %v315 = vld [vmem:[%s271 + $0x8] sm:$0xff]
        %v316 = vld [vmem:[%s271 + $0x10] sm:$0xff]
        %v317 = vld [vmem:[%s271 + $0x18] sm:$0xff]
        %v318 = vld [vmem:[%s271 + $0x20] sm:$0xff]
        %v319 = vld [vmem:[%s271 + $0x28] sm:$0xff]
        %v320 = vld [vmem:[%s271 + $0x30] sm:$0xff]
        %v321 = vld [vmem:[%s271 + $0x38] sm:$0xff]
        %v322 = vld [vmem:[%s271 + $0x40] sm:$0xff]
        %v323 = vld [vmem:[%s271 + $0x48] sm:$0xff]
        %v324 = vld [vmem:[%s271 + $0x50] sm:$0xff]
        %v325 = vld [vmem:[%s271 + $0x58] sm:$0xff]
        %v326 = vld [vmem:[%s271 + $0x60] sm:$0xff]
        %v327 = vld [vmem:[%s271 + $0x68] sm:$0xff]
        %v328 = vld [vmem:[%s271 + $0x70] sm:$0xff]
        %v329 = vld [vmem:[%s271 + $0x78] sm:$0xff]
        %v330 = vld [vmem:[%s271 + $0x80] sm:$0xff]
        %v331 = vld [vmem:[%s271 + $0x88] sm:$0xff]
        %v332 = vld [vmem:[%s271 + $0x90] sm:$0xff]
        %v333 = vld [vmem:[%s271 + $0x98] sm:$0xff]
        %v334 = vld [vmem:[%s271 + $0xa0] sm:$0xff]
        %v335 = vld [vmem:[%s271 + $0xa8] sm:$0xff]
        %v336 = vld [vmem:[%s271 + $0xb0] sm:$0xff]
        %v337 = vld [vmem:[%s271 + $0xb8] sm:$0xff]
        %v338 = vld [vmem:[%s271 + $0xc0] sm:$0xff]
        %v339 = vld [vmem:[%s271 + $0xc8] sm:$0xff]
        %v340 = vld [vmem:[%s271 + $0xd0] sm:$0xff]
        %v341 = vld [vmem:[%s271 + $0xd8] sm:$0xff]
        %v342 = vld [vmem:[%s271 + $0xe0] sm:$0xff]
        %v343 = vld [vmem:[%s271 + $0xe8] sm:$0xff]
        %v344 = vld [vmem:[%s271 + $0xf0] sm:$0xff]
        %v345 = vld [vmem:[%s271 + $0xf8] sm:$0xff]
        %v378 = vunpack.c.l.b16 %v282
        %v379 = vunpack.c.l.b16 %v283
        %v380 = vunpack.c.l.b16 %v284
        %v381 = vunpack.c.l.b16 %v285
        %v382 = vunpack.c.l.b16 %v286
        %v383 = vunpack.c.l.b16 %v287
        %v384 = vunpack.c.l.b16 %v288
        %v385 = vunpack.c.l.b16 %v289
        %v386 = vunpack.c.l.b16 %v290
        %v387 = vunpack.c.l.b16 %v291
        %v388 = vunpack.c.l.b16 %v292
        %v389 = vunpack.c.l.b16 %v293
        %v390 = vunpack.c.l.b16 %v294
        %v391 = vunpack.c.l.b16 %v295
        %v392 = vunpack.c.l.b16 %v296
        %v393 = vunpack.c.l.b16 %v297
        %v394 = vunpack.c.l.b16 %v298
        %v395 = vunpack.c.l.b16 %v299
        %v396 = vunpack.c.l.b16 %v300
        %v397 = vunpack.c.l.b16 %v301
        %v398 = vunpack.c.l.b16 %v302
        %v399 = vunpack.c.l.b16 %v303
        %v400 = vunpack.c.l.b16 %v304
        %v401 = vunpack.c.l.b16 %v305
        %v402 = vunpack.c.l.b16 %v306
        %v403 = vunpack.c.l.b16 %v307
        %v404 = vunpack.c.l.b16 %v308
        %v405 = vunpack.c.l.b16 %v309
        %v406 = vunpack.c.l.b16 %v310
        %v407 = vunpack.c.l.b16 %v311
        %v408 = vunpack.c.l.b16 %v312
        %v409 = vunpack.c.l.b16 %v313
        %v410 = vpack.c.b16 %v379, %v378
        %v411 = vpack.c.b16 %v381, %v380
        %v412 = vpack.c.b16 %v383, %v382
        %v413 = vpack.c.b16 %v385, %v384
        %v414 = vpack.c.b16 %v387, %v386
        %v415 = vpack.c.b16 %v389, %v388
        %v416 = vpack.c.b16 %v391, %v390
        %v417 = vpack.c.b16 %v393, %v392
        %v418 = vpack.c.b16 %v395, %v394
        %v419 = vpack.c.b16 %v397, %v396
        %v420 = vpack.c.b16 %v399, %v398
        %v421 = vpack.c.b16 %v401, %v400
        %v422 = vpack.c.b16 %v403, %v402
        %v423 = vpack.c.b16 %v405, %v404
        %v424 = vpack.c.b16 %v407, %v406
        %v425 = vpack.c.b16 %v409, %v408
        %v474 = vunpack.c.l.b16 %v314
        %v475 = vunpack.c.h.b16 %v314
        %v476 = vunpack.c.l.b16 %v315
        %v477 = vunpack.c.h.b16 %v315
        %v478 = vunpack.c.l.b16 %v316
        %v479 = vunpack.c.h.b16 %v316
        %v480 = vunpack.c.l.b16 %v317
        %v481 = vunpack.c.h.b16 %v317
        %v482 = vunpack.c.l.b16 %v318
        %v483 = vunpack.c.h.b16 %v318
        %v484 = vunpack.c.l.b16 %v319
        %v485 = vunpack.c.h.b16 %v319
        %v486 = vunpack.c.l.b16 %v320
        %v487 = vunpack.c.h.b16 %v320
        %v488 = vunpack.c.l.b16 %v321
        %v489 = vunpack.c.h.b16 %v321
        %v490 = vunpack.c.l.b16 %v322
        %v491 = vunpack.c.h.b16 %v322
        %v492 = vunpack.c.l.b16 %v323
        %v493 = vunpack.c.h.b16 %v323
        %v494 = vunpack.c.l.b16 %v324
        %v495 = vunpack.c.h.b16 %v324
        %v496 = vunpack.c.l.b16 %v325
        %v497 = vunpack.c.h.b16 %v325
        %v498 = vunpack.c.l.b16 %v326
        %v499 = vunpack.c.h.b16 %v326
        %v500 = vunpack.c.l.b16 %v327
        %v501 = vunpack.c.h.b16 %v327
        %v502 = vunpack.c.l.b16 %v328
        %v503 = vunpack.c.h.b16 %v328
        %v504 = vunpack.c.l.b16 %v329
        %v505 = vunpack.c.h.b16 %v329
        %v506 = vunpack.c.l.b16 %v330
        %v507 = vunpack.c.h.b16 %v330
        %v508 = vunpack.c.l.b16 %v331
        %v509 = vunpack.c.h.b16 %v331
        %v510 = vunpack.c.l.b16 %v332
        %v511 = vunpack.c.h.b16 %v332
        %v512 = vunpack.c.l.b16 %v333
        %v513 = vunpack.c.h.b16 %v333
        %v514 = vunpack.c.l.b16 %v334
        %v515 = vunpack.c.h.b16 %v334
        %v516 = vunpack.c.l.b16 %v335
        %v517 = vunpack.c.h.b16 %v335
        %v518 = vunpack.c.l.b16 %v336
        %v519 = vunpack.c.h.b16 %v336
        %v520 = vunpack.c.l.b16 %v337
        %v521 = vunpack.c.h.b16 %v337
        %v522 = vunpack.c.l.b16 %v338
        %v523 = vunpack.c.h.b16 %v338
        %v524 = vunpack.c.l.b16 %v339
        %v525 = vunpack.c.h.b16 %v339
        %v526 = vunpack.c.l.b16 %v340
        %v527 = vunpack.c.h.b16 %v340
        %v528 = vunpack.c.l.b16 %v341
        %v529 = vunpack.c.h.b16 %v341
        %v530 = vunpack.c.l.b16 %v342
        %v531 = vunpack.c.h.b16 %v342
        %v532 = vunpack.c.l.b16 %v343
        %v533 = vunpack.c.h.b16 %v343
        %v534 = vunpack.c.l.b16 %v344
        %v535 = vunpack.c.h.b16 %v344
        %v536 = vunpack.c.l.b16 %v345
        %v537 = vunpack.c.h.b16 %v345
        %v538 = vpack.c.b16 %v478, %v474
        %v539 = vpack.c.b16 %v479, %v475
        %v540 = vpack.c.b16 %v480, %v476
        %v541 = vpack.c.b16 %v481, %v477
        %v542 = vpack.c.b16 %v486, %v482
        %v543 = vpack.c.b16 %v487, %v483
        %v544 = vpack.c.b16 %v488, %v484
        %v545 = vpack.c.b16 %v489, %v485
        %v546 = vpack.c.b16 %v494, %v490
        %v547 = vpack.c.b16 %v495, %v491
        %v548 = vpack.c.b16 %v496, %v492
        %v549 = vpack.c.b16 %v497, %v493
        %v550 = vpack.c.b16 %v502, %v498
        %v551 = vpack.c.b16 %v503, %v499
        %v552 = vpack.c.b16 %v504, %v500
        %v553 = vpack.c.b16 %v505, %v501
        %v554 = vpack.c.b16 %v510, %v506
        %v555 = vpack.c.b16 %v511, %v507
        %v556 = vpack.c.b16 %v512, %v508
        %v557 = vpack.c.b16 %v513, %v509
        %v558 = vpack.c.b16 %v518, %v514
        %v559 = vpack.c.b16 %v519, %v515
        %v560 = vpack.c.b16 %v520, %v516
        %v561 = vpack.c.b16 %v521, %v517
        %v562 = vpack.c.b16 %v526, %v522
        %v563 = vpack.c.b16 %v527, %v523
        %v564 = vpack.c.b16 %v528, %v524
        %v565 = vpack.c.b16 %v529, %v525
        %v566 = vpack.c.b16 %v534, %v530
        %v567 = vpack.c.b16 %v535, %v531
        %v568 = vpack.c.b16 %v536, %v532
        %v569 = vpack.c.b16 %v537, %v533
        %602 = vmatprep.subr.bf16.mxu0 %v567
        %603 = vmatpush1.bf16.msra.mxu0 %v566
        %604 = vmatprep.subr.bf16.mxu0 %v563
        %605 = vmatpush1.bf16.msra.mxu0 %v562
        %606 = vmatprep.subr.bf16.mxu0 %v559
        %607 = vmatpush1.bf16.msra.mxu0 %v558
        %608 = vmatprep.subr.bf16.mxu0 %v555
        %609 = vmatpush1.bf16.msra.mxu0 %v554
        %610 = vmatprep.subr.bf16.mxu0 %v551
        %611 = vmatpush1.bf16.msra.mxu0 %v550
        %612 = vmatprep.subr.bf16.mxu0 %v547
        %613 = vmatpush1.bf16.msra.mxu0 %v546
        %614 = vmatprep.subr.bf16.mxu0 %v543
        %615 = vmatpush1.bf16.msra.mxu0 %v542
        %616 = vmatprep.subr.bf16.mxu0 %v539
        %617 = vmatpush1.bf16.msra.mxu0 %v538
        %618 = vmatprep.subr.bf16.mxu0 0
        %619 = vmatpush2.bf16.msra.mxu0 0
        %620 = vmatprep.subr.bf16.mxu0 0
        %621 = vmatpush2.bf16.msra.mxu0 0
        %622 = vmatprep.subr.bf16.mxu0 0
        %623 = vmatpush2.bf16.msra.mxu0 0
        %624 = vmatprep.subr.bf16.mxu0 0
        %625 = vmatpush2.bf16.msra.mxu0 0
        %626 = vmatprep.subr.bf16.mxu0 0
        %627 = vmatpush2.bf16.msra.mxu0 0
        %628 = vmatprep.subr.bf16.mxu0 0
        %629 = vmatpush2.bf16.msra.mxu0 0
        %630 = vmatprep.subr.bf16.mxu0 0
        %631 = vmatpush2.bf16.msra.mxu0 0
        %632 = vmatprep.subr.bf16.mxu0 0
        %633 = vmatpush2.bf16.msra.mxu0 0
        %634 = vmatprep.mubr.bf16.mxu0 0
        %635 = vmatmul.mubr.bf16.gmra.mxu0 %v410
        %v636 = vpop.f32.mrf.mxu0
        %v637 = vadd.f32 0.0, %v636
        %v638 = vpop.f32.mrf.mxu0
        %v639 = vadd.f32 0.0, %v638
        %v640 = vpop.f32.mrf.mxu0
        %v641 = vadd.f32 0.0, %v640
        %v642 = vpop.f32.mrf.mxu0
        %v643 = vadd.f32 0.0, %v642
        %644 = vmatprep.mubr.bf16.mxu0 0
        %645 = vmatmul.mubr.bf16.gmra.mxu0 %v411
        %v646 = vpop.f32.mrf.mxu0
        %v647 = vadd.f32 0.0, %v646
        %v648 = vpop.f32.mrf.mxu0
        %v649 = vadd.f32 0.0, %v648
        %v650 = vpop.f32.mrf.mxu0
        %v651 = vadd.f32 0.0, %v650
        %v652 = vpop.f32.mrf.mxu0
        %v653 = vadd.f32 0.0, %v652
        %654 = vmatprep.mubr.bf16.mxu0 0
        %655 = vmatmul.mubr.bf16.gmra.mxu0 %v412
        %v656 = vpop.f32.mrf.mxu0
        %v657 = vadd.f32 0.0, %v656
        %v658 = vpop.f32.mrf.mxu0
        %v659 = vadd.f32 0.0, %v658
        %v660 = vpop.f32.mrf.mxu0
        %v661 = vadd.f32 0.0, %v660
        %v662 = vpop.f32.mrf.mxu0
        %v663 = vadd.f32 0.0, %v662
        %664 = vmatprep.mubr.bf16.mxu0 0
        %665 = vmatmul.mubr.bf16.gmra.mxu0 %v413
        %v666 = vpop.f32.mrf.mxu0
        %v667 = vadd.f32 0.0, %v666
        %v668 = vpop.f32.mrf.mxu0
        %v669 = vadd.f32 0.0, %v668
        %v670 = vpop.f32.mrf.mxu0
        %v671 = vadd.f32 0.0, %v670
        %v672 = vpop.f32.mrf.mxu0
        %v673 = vadd.f32 0.0, %v672
        %674 = vmatprep.mubr.bf16.mxu0 0
        %675 = vmatmul.mubr.bf16.gmra.mxu0 %v414
        %v676 = vpop.f32.mrf.mxu0
        %v677 = vadd.f32 0.0, %v676
        %v678 = vpop.f32.mrf.mxu0
        %v679 = vadd.f32 0.0, %v678
        %v680 = vpop.f32.mrf.mxu0
        %v681 = vadd.f32 0.0, %v680
        %v682 = vpop.f32.mrf.mxu0
        %v683 = vadd.f32 0.0, %v682
        %684 = vmatprep.mubr.bf16.mxu0 0
        %685 = vmatmul.mubr.bf16.gmra.mxu0 %v415
        %v686 = vpop.f32.mrf.mxu0
        %v687 = vadd.f32 0.0, %v686
        %v688 = vpop.f32.mrf.mxu0
        %v689 = vadd.f32 0.0, %v688
        %v690 = vpop.f32.mrf.mxu0
        %v691 = vadd.f32 0.0, %v690
        %v692 = vpop.f32.mrf.mxu0
        %v693 = vadd.f32 0.0, %v692
        %694 = vmatprep.mubr.bf16.mxu0 0
        %695 = vmatmul.mubr.bf16.gmra.mxu0 %v416
        %v696 = vpop.f32.mrf.mxu0
        %v697 = vadd.f32 0.0, %v696
        %v698 = vpop.f32.mrf.mxu0
        %v699 = vadd.f32 0.0, %v698
        %v700 = vpop.f32.mrf.mxu0
        %v701 = vadd.f32 0.0, %v700
        %v702 = vpop.f32.mrf.mxu0
        %v703 = vadd.f32 0.0, %v702
        %704 = vmatprep.mubr.bf16.mxu0 0
        %705 = vmatmul.mubr.bf16.gmra.mxu0 %v417
        %v706 = vpop.f32.mrf.mxu0
        %v707 = vadd.f32 0.0, %v706
        %v708 = vpop.f32.mrf.mxu0
        %v709 = vadd.f32 0.0, %v708
        %v710 = vpop.f32.mrf.mxu0
        %v711 = vadd.f32 0.0, %v710
        %v712 = vpop.f32.mrf.mxu0
        %v713 = vadd.f32 0.0, %v712
        %714 = vmatprep.mubr.bf16.mxu0 0
        %715 = vmatmul.mubr.bf16.gmra.mxu0 %v418
        %v716 = vpop.f32.mrf.mxu0
        %v717 = vadd.f32 0.0, %v716
        %v718 = vpop.f32.mrf.mxu0
        %v719 = vadd.f32 0.0, %v718
        %v720 = vpop.f32.mrf.mxu0
        %v721 = vadd.f32 0.0, %v720
        %v722 = vpop.f32.mrf.mxu0
        %v723 = vadd.f32 0.0, %v722
        %724 = vmatprep.mubr.bf16.mxu0 0
        %725 = vmatmul.mubr.bf16.gmra.mxu0 %v419
        %v726 = vpop.f32.mrf.mxu0
        %v727 = vadd.f32 0.0, %v726
        %v728 = vpop.f32.mrf.mxu0
        %v729 = vadd.f32 0.0, %v728
        %v730 = vpop.f32.mrf.mxu0
        %v731 = vadd.f32 0.0, %v730
        %v732 = vpop.f32.mrf.mxu0
        %v733 = vadd.f32 0.0, %v732
        %734 = vmatprep.mubr.bf16.mxu0 0
        %735 = vmatmul.mubr.bf16.gmra.mxu0 %v420
        %v736 = vpop.f32.mrf.mxu0
        %v737 = vadd.f32 0.0, %v736
        %v738 = vpop.f32.mrf.mxu0
        %v739 = vadd.f32 0.0, %v738
        %v740 = vpop.f32.mrf.mxu0
        %v741 = vadd.f32 0.0, %v740
        %v742 = vpop.f32.mrf.mxu0
        %v743 = vadd.f32 0.0, %v742
        %744 = vmatprep.mubr.bf16.mxu0 0
        %745 = vmatmul.mubr.bf16.gmra.mxu0 %v421
        %v746 = vpop.f32.mrf.mxu0
        %v747 = vadd.f32 0.0, %v746
        %v748 = vpop.f32.mrf.mxu0
        %v749 = vadd.f32 0.0, %v748
        %v750 = vpop.f32.mrf.mxu0
        %v751 = vadd.f32 0.0, %v750
        %v752 = vpop.f32.mrf.mxu0
        %v753 = vadd.f32 0.0, %v752
        %754 = vmatprep.mubr.bf16.mxu0 0
        %755 = vmatmul.mubr.bf16.gmra.mxu0 %v422
        %v756 = vpop.f32.mrf.mxu0
        %v757 = vadd.f32 0.0, %v756
        %v758 = vpop.f32.mrf.mxu0
        %v759 = vadd.f32 0.0, %v758
        %v760 = vpop.f32.mrf.mxu0
        %v761 = vadd.f32 0.0, %v760
        %v762 = vpop.f32.mrf.mxu0
        %v763 = vadd.f32 0.0, %v762
        %764 = vmatprep.mubr.bf16.mxu0 0
        %765 = vmatmul.mubr.bf16.gmra.mxu0 %v423
        %v766 = vpop.f32.mrf.mxu0
        %v767 = vadd.f32 0.0, %v766
        %v768 = vpop.f32.mrf.mxu0
        %v769 = vadd.f32 0.0, %v768
        %v770 = vpop.f32.mrf.mxu0
        %v771 = vadd.f32 0.0, %v770
        %v772 = vpop.f32.mrf.mxu0
        %v773 = vadd.f32 0.0, %v772
        %774 = vmatprep.mubr.bf16.mxu0 0
        %775 = vmatmul.mubr.bf16.gmra.mxu0 %v424
        %v776 = vpop.f32.mrf.mxu0
        %v777 = vadd.f32 0.0, %v776
        %v778 = vpop.f32.mrf.mxu0
        %v779 = vadd.f32 0.0, %v778
        %v780 = vpop.f32.mrf.mxu0
        %v781 = vadd.f32 0.0, %v780
        %v782 = vpop.f32.mrf.mxu0
        %v783 = vadd.f32 0.0, %v782
        %784 = vmatprep.mubr.bf16.mxu0 0
        %785 = vmatmul.mubr.bf16.gmra.mxu0 %v425
        %v786 = vpop.f32.mrf.mxu0
        %v787 = vadd.f32 0.0, %v786
        %v788 = vpop.f32.mrf.mxu0
        %v789 = vadd.f32 0.0, %v788
        %v790 = vpop.f32.mrf.mxu0
        %v791 = vadd.f32 0.0, %v790
        %v792 = vpop.f32.mrf.mxu0
        %v793 = vadd.f32 0.0, %v792
        %794 = vdwg.mxu0
        %795 = vmatprep.subr.bf16.mxu0 %v569
        %796 = vmatpush1.bf16.msra.mxu0 %v568
        %797 = vmatprep.subr.bf16.mxu0 %v565
        %798 = vmatpush1.bf16.msra.mxu0 %v564
        %799 = vmatprep.subr.bf16.mxu0 %v561
        %800 = vmatpush1.bf16.msra.mxu0 %v560
        %801 = vmatprep.subr.bf16.mxu0 %v557
        %802 = vmatpush1.bf16.msra.mxu0 %v556
        %803 = vmatprep.subr.bf16.mxu0 %v553
        %804 = vmatpush1.bf16.msra.mxu0 %v552
        %805 = vmatprep.subr.bf16.mxu0 %v549
        %806 = vmatpush1.bf16.msra.mxu0 %v548
        %807 = vmatprep.subr.bf16.mxu0 %v545
        %808 = vmatpush1.bf16.msra.mxu0 %v544
        %809 = vmatprep.subr.bf16.mxu0 %v541
        %810 = vmatpush1.bf16.msra.mxu0 %v540
        %811 = vmatprep.subr.bf16.mxu0 0
        %812 = vmatpush2.bf16.msra.mxu0 0
        %813 = vmatprep.subr.bf16.mxu0 0
        %814 = vmatpush2.bf16.msra.mxu0 0
        %815 = vmatprep.subr.bf16.mxu0 0
        %816 = vmatpush2.bf16.msra.mxu0 0
        %817 = vmatprep.subr.bf16.mxu0 0
        %818 = vmatpush2.bf16.msra.mxu0 0
        %819 = vmatprep.subr.bf16.mxu0 0
        %820 = vmatpush2.bf16.msra.mxu0 0
        %821 = vmatprep.subr.bf16.mxu0 0
        %822 = vmatpush2.bf16.msra.mxu0 0
        %823 = vmatprep.subr.bf16.mxu0 0
        %824 = vmatpush2.bf16.msra.mxu0 0
        %825 = vmatprep.subr.bf16.mxu0 0
        %826 = vmatpush2.bf16.msra.mxu0 0
        %827 = vmatprep.mubr.bf16.mxu0 0
        %828 = vmatmul.mubr.bf16.gmra.mxu0 %v410
        %v829 = vpop.f32.mrf.mxu0
        %v830 = vadd.f32 0.0, %v829
        %v831 = vpop.f32.mrf.mxu0
        %v832 = vadd.f32 0.0, %v831
        %v833 = vpop.f32.mrf.mxu0
        %v834 = vadd.f32 0.0, %v833
        %v835 = vpop.f32.mrf.mxu0
        %v836 = vadd.f32 0.0, %v835
        %837 = vmatprep.mubr.bf16.mxu0 0
        %838 = vmatmul.mubr.bf16.gmra.mxu0 %v411
        %v839 = vpop.f32.mrf.mxu0
        %v840 = vadd.f32 0.0, %v839
        %v841 = vpop.f32.mrf.mxu0
        %v842 = vadd.f32 0.0, %v841
        %v843 = vpop.f32.mrf.mxu0
        %v844 = vadd.f32 0.0, %v843
        %v845 = vpop.f32.mrf.mxu0
        %v846 = vadd.f32 0.0, %v845
        %847 = vmatprep.mubr.bf16.mxu0 0
        %848 = vmatmul.mubr.bf16.gmra.mxu0 %v412
        %v849 = vpop.f32.mrf.mxu0
        %v850 = vadd.f32 0.0, %v849
        %v851 = vpop.f32.mrf.mxu0
        %v852 = vadd.f32 0.0, %v851
        %v853 = vpop.f32.mrf.mxu0
        %v854 = vadd.f32 0.0, %v853
        %v855 = vpop.f32.mrf.mxu0
        %v856 = vadd.f32 0.0, %v855
        %857 = vmatprep.mubr.bf16.mxu0 0
        %858 = vmatmul.mubr.bf16.gmra.mxu0 %v413
        %v859 = vpop.f32.mrf.mxu0
        %v860 = vadd.f32 0.0, %v859
        %v861 = vpop.f32.mrf.mxu0
        %v862 = vadd.f32 0.0, %v861
        %v863 = vpop.f32.mrf.mxu0
        %v864 = vadd.f32 0.0, %v863
        %v865 = vpop.f32.mrf.mxu0
        %v866 = vadd.f32 0.0, %v865
        %867 = vmatprep.mubr.bf16.mxu0 0
        %868 = vmatmul.mubr.bf16.gmra.mxu0 %v414
        %v869 = vpop.f32.mrf.mxu0
        %v870 = vadd.f32 0.0, %v869
        %v871 = vpop.f32.mrf.mxu0
        %v872 = vadd.f32 0.0, %v871
        %v873 = vpop.f32.mrf.mxu0
        %v874 = vadd.f32 0.0, %v873
        %v875 = vpop.f32.mrf.mxu0
        %v876 = vadd.f32 0.0, %v875
        %877 = vmatprep.mubr.bf16.mxu0 0
        %878 = vmatmul.mubr.bf16.gmra.mxu0 %v415
        %v879 = vpop.f32.mrf.mxu0
        %v880 = vadd.f32 0.0, %v879
        %v881 = vpop.f32.mrf.mxu0
        %v882 = vadd.f32 0.0, %v881
        %v883 = vpop.f32.mrf.mxu0
        %v884 = vadd.f32 0.0, %v883
        %v885 = vpop.f32.mrf.mxu0
        %v886 = vadd.f32 0.0, %v885
        %887 = vmatprep.mubr.bf16.mxu0 0
        %888 = vmatmul.mubr.bf16.gmra.mxu0 %v416
        %v889 = vpop.f32.mrf.mxu0
        %v890 = vadd.f32 0.0, %v889
        %v891 = vpop.f32.mrf.mxu0
        %v892 = vadd.f32 0.0, %v891
        %v893 = vpop.f32.mrf.mxu0
        %v894 = vadd.f32 0.0, %v893
        %v895 = vpop.f32.mrf.mxu0
        %v896 = vadd.f32 0.0, %v895
        %897 = vmatprep.mubr.bf16.mxu0 0
        %898 = vmatmul.mubr.bf16.gmra.mxu0 %v417
        %v899 = vpop.f32.mrf.mxu0
        %v900 = vadd.f32 0.0, %v899
        %v901 = vpop.f32.mrf.mxu0
        %v902 = vadd.f32 0.0, %v901
        %v903 = vpop.f32.mrf.mxu0
        %v904 = vadd.f32 0.0, %v903
        %v905 = vpop.f32.mrf.mxu0
        %v906 = vadd.f32 0.0, %v905
        %907 = vmatprep.mubr.bf16.mxu0 0
        %908 = vmatmul.mubr.bf16.gmra.mxu0 %v418
        %v909 = vpop.f32.mrf.mxu0
        %v910 = vadd.f32 0.0, %v909
        %v911 = vpop.f32.mrf.mxu0
        %v912 = vadd.f32 0.0, %v911
        %v913 = vpop.f32.mrf.mxu0
        %v914 = vadd.f32 0.0, %v913
        %v915 = vpop.f32.mrf.mxu0
        %v916 = vadd.f32 0.0, %v915
        %917 = vmatprep.mubr.bf16.mxu0 0
        %918 = vmatmul.mubr.bf16.gmra.mxu0 %v419
        %v919 = vpop.f32.mrf.mxu0
        %v920 = vadd.f32 0.0, %v919
        %v921 = vpop.f32.mrf.mxu0
        %v922 = vadd.f32 0.0, %v921
        %v923 = vpop.f32.mrf.mxu0
        %v924 = vadd.f32 0.0, %v923
        %v925 = vpop.f32.mrf.mxu0
        %v926 = vadd.f32 0.0, %v925
        %927 = vmatprep.mubr.bf16.mxu0 0
        %928 = vmatmul.mubr.bf16.gmra.mxu0 %v420
        %v929 = vpop.f32.mrf.mxu0
        %v930 = vadd.f32 0.0, %v929
        %v931 = vpop.f32.mrf.mxu0
        %v932 = vadd.f32 0.0, %v931
        %v933 = vpop.f32.mrf.mxu0
        %v934 = vadd.f32 0.0, %v933
        %v935 = vpop.f32.mrf.mxu0
        %v936 = vadd.f32 0.0, %v935
        %937 = vmatprep.mubr.bf16.mxu0 0
        %938 = vmatmul.mubr.bf16.gmra.mxu0 %v421
        %v939 = vpop.f32.mrf.mxu0
        %v940 = vadd.f32 0.0, %v939
        %v941 = vpop.f32.mrf.mxu0
        %v942 = vadd.f32 0.0, %v941
        %v943 = vpop.f32.mrf.mxu0
        %v944 = vadd.f32 0.0, %v943
        %v945 = vpop.f32.mrf.mxu0
        %v946 = vadd.f32 0.0, %v945
        %947 = vmatprep.mubr.bf16.mxu0 0
        %948 = vmatmul.mubr.bf16.gmra.mxu0 %v422
        %v949 = vpop.f32.mrf.mxu0
        %v950 = vadd.f32 0.0, %v949
        %v951 = vpop.f32.mrf.mxu0
        %v952 = vadd.f32 0.0, %v951
        %v953 = vpop.f32.mrf.mxu0
        %v954 = vadd.f32 0.0, %v953
        %v955 = vpop.f32.mrf.mxu0
        %v956 = vadd.f32 0.0, %v955
        %957 = vmatprep.mubr.bf16.mxu0 0
        %958 = vmatmul.mubr.bf16.gmra.mxu0 %v423
        %v959 = vpop.f32.mrf.mxu0
        %v960 = vadd.f32 0.0, %v959
        %v961 = vpop.f32.mrf.mxu0
        %v962 = vadd.f32 0.0, %v961
        %v963 = vpop.f32.mrf.mxu0
        %v964 = vadd.f32 0.0, %v963
        %v965 = vpop.f32.mrf.mxu0
        %v966 = vadd.f32 0.0, %v965
        %967 = vmatprep.mubr.bf16.mxu0 0
        %968 = vmatmul.mubr.bf16.gmra.mxu0 %v424
        %v969 = vpop.f32.mrf.mxu0
        %v970 = vadd.f32 0.0, %v969
        %v971 = vpop.f32.mrf.mxu0
        %v972 = vadd.f32 0.0, %v971
        %v973 = vpop.f32.mrf.mxu0
        %v974 = vadd.f32 0.0, %v973
        %v975 = vpop.f32.mrf.mxu0
        %v976 = vadd.f32 0.0, %v975
        %977 = vmatprep.mubr.bf16.mxu0 0
        %978 = vmatmul.mubr.bf16.gmra.mxu0 %v425
        %v979 = vpop.f32.mrf.mxu0
        %v980 = vadd.f32 0.0, %v979
        %v981 = vpop.f32.mrf.mxu0
        %v982 = vadd.f32 0.0, %v981
        %v983 = vpop.f32.mrf.mxu0
        %v984 = vadd.f32 0.0, %v983
        %v985 = vpop.f32.mrf.mxu0
        %v986 = vadd.f32 0.0, %v985
        %987 = vdwg.mxu0
        %v988 = vld [vmem:[%s254] sm:$0xff]
        %v989 = vld [vmem:[%s254 + $0x8] sm:$0xff]
        %v990 = vld [vmem:[%s254 + $0x10] sm:$0xff]
        %v991 = vld [vmem:[%s254 + $0x18] sm:$0xff]
        %v992 = vld [vmem:[%s254 + $0x20] sm:$0xff]
        %v993 = vld [vmem:[%s254 + $0x28] sm:$0xff]
        %v994 = vld [vmem:[%s254 + $0x30] sm:$0xff]
        %v995 = vld [vmem:[%s254 + $0x38] sm:$0xff]
        %v996 = vld [vmem:[%s254 + $0x40] sm:$0xff]
        %v997 = vld [vmem:[%s254 + $0x48] sm:$0xff]
        %v998 = vld [vmem:[%s254 + $0x50] sm:$0xff]
        %v999 = vld [vmem:[%s254 + $0x58] sm:$0xff]
        %v1000 = vld [vmem:[%s254 + $0x60] sm:$0xff]
        %v1001 = vld [vmem:[%s254 + $0x68] sm:$0xff]
        %v1002 = vld [vmem:[%s254 + $0x70] sm:$0xff]
        %v1003 = vld [vmem:[%s254 + $0x78] sm:$0xff]
        %v1004 = vld [vmem:[%s254 + $0x80] sm:$0xff]
        %v1005 = vld [vmem:[%s254 + $0x88] sm:$0xff]
        %v1006 = vld [vmem:[%s254 + $0x90] sm:$0xff]
        %v1007 = vld [vmem:[%s254 + $0x98] sm:$0xff]
        %v1008 = vld [vmem:[%s254 + $0xa0] sm:$0xff]
        %v1009 = vld [vmem:[%s254 + $0xa8] sm:$0xff]
        %v1010 = vld [vmem:[%s254 + $0xb0] sm:$0xff]
        %v1011 = vld [vmem:[%s254 + $0xb8] sm:$0xff]
        %v1012 = vld [vmem:[%s254 + $0xc0] sm:$0xff]
        %v1013 = vld [vmem:[%s254 + $0xc8] sm:$0xff]
        %v1014 = vld [vmem:[%s254 + $0xd0] sm:$0xff]
        %v1015 = vld [vmem:[%s254 + $0xd8] sm:$0xff]
        %v1016 = vld [vmem:[%s254 + $0xe0] sm:$0xff]
        %v1017 = vld [vmem:[%s254 + $0xe8] sm:$0xff]
        %v1018 = vld [vmem:[%s254 + $0xf0] sm:$0xff]
        %v1019 = vld [vmem:[%s254 + $0xf8] sm:$0xff]
        %v1020 = vld [vmem:[%s259] sm:$0xf]
        %1022 = vset.pattern.permute.xlu0 0
        %1023 = vperm.xlu0 %1022, %v988
        %v1024 = vpop.permute.xlu0 %1023
        %1027 = vset.pattern.permute.xlu0 0
        %1028 = vperm.xlu0 %1027, %v989
        %v1029 = vpop.permute.xlu0 %1028
        %1032 = vset.pattern.permute.xlu0 0
        %1033 = vperm.xlu0 %1032, %v990
        %v1034 = vpop.permute.xlu0 %1033
        %1037 = vset.pattern.permute.xlu0 0
        %1038 = vperm.xlu0 %1037, %v991
        %v1039 = vpop.permute.xlu0 %1038
        %1042 = vset.pattern.permute.xlu0 0
        %1043 = vperm.xlu0 %1042, %v992
        %v1044 = vpop.permute.xlu0 %1043
        %1047 = vset.pattern.permute.xlu0 0
        %1048 = vperm.xlu0 %1047, %v993
        %v1049 = vpop.permute.xlu0 %1048
        %1052 = vset.pattern.permute.xlu0 0
        %1053 = vperm.xlu0 %1052, %v994
        %v1054 = vpop.permute.xlu0 %1053
        %1057 = vset.pattern.permute.xlu0 0
        %1058 = vperm.xlu0 %1057, %v995
        %v1059 = vpop.permute.xlu0 %1058
        %1062 = vset.pattern.permute.xlu0 0
        %1063 = vperm.xlu0 %1062, %v996
        %v1064 = vpop.permute.xlu0 %1063
        %1067 = vset.pattern.permute.xlu0 0
        %1068 = vperm.xlu0 %1067, %v997
        %v1069 = vpop.permute.xlu0 %1068
        %1072 = vset.pattern.permute.xlu0 0
        %1073 = vperm.xlu0 %1072, %v998
        %v1074 = vpop.permute.xlu0 %1073
        %1077 = vset.pattern.permute.xlu0 0
        %1078 = vperm.xlu0 %1077, %v999
        %v1079 = vpop.permute.xlu0 %1078
        %1082 = vset.pattern.permute.xlu0 0
        %1083 = vperm.xlu0 %1082, %v1000
        %v1084 = vpop.permute.xlu0 %1083
        %1087 = vset.pattern.permute.xlu0 0
        %1088 = vperm.xlu0 %1087, %v1001
        %v1089 = vpop.permute.xlu0 %1088
        %1092 = vset.pattern.permute.xlu0 0
        %1093 = vperm.xlu0 %1092, %v1002
        %v1094 = vpop.permute.xlu0 %1093
        %1097 = vset.pattern.permute.xlu0 0
        %1098 = vperm.xlu0 %1097, %v1003
        %v1099 = vpop.permute.xlu0 %1098
        %1102 = vset.pattern.permute.xlu0 0
        %1103 = vperm.xlu0 %1102, %v1004
        %v1104 = vpop.permute.xlu0 %1103
        %1107 = vset.pattern.permute.xlu0 0
        %1108 = vperm.xlu0 %1107, %v1005
        %v1109 = vpop.permute.xlu0 %1108
        %1112 = vset.pattern.permute.xlu0 0
        %1113 = vperm.xlu0 %1112, %v1006
        %v1114 = vpop.permute.xlu0 %1113
        %1117 = vset.pattern.permute.xlu0 0
        %1118 = vperm.xlu0 %1117, %v1007
        %v1119 = vpop.permute.xlu0 %1118
        %1122 = vset.pattern.permute.xlu0 0
        %1123 = vperm.xlu0 %1122, %v1008
        %v1124 = vpop.permute.xlu0 %1123
        %1127 = vset.pattern.permute.xlu0 0
        %1128 = vperm.xlu0 %1127, %v1009
        %v1129 = vpop.permute.xlu0 %1128
        %1132 = vset.pattern.permute.xlu0 0
        %1133 = vperm.xlu0 %1132, %v1010
        %v1134 = vpop.permute.xlu0 %1133
        %1137 = vset.pattern.permute.xlu0 0
        %1138 = vperm.xlu0 %1137, %v1011
        %v1139 = vpop.permute.xlu0 %1138
        %1142 = vset.pattern.permute.xlu0 0
        %1143 = vperm.xlu0 %1142, %v1012
        %v1144 = vpop.permute.xlu0 %1143
        %1147 = vset.pattern.permute.xlu0 0
        %1148 = vperm.xlu0 %1147, %v1013
        %v1149 = vpop.permute.xlu0 %1148
        %1152 = vset.pattern.permute.xlu0 0
        %1153 = vperm.xlu0 %1152, %v1014
        %v1154 = vpop.permute.xlu0 %1153
        %1157 = vset.pattern.permute.xlu0 0
        %1158 = vperm.xlu0 %1157, %v1015
        %v1159 = vpop.permute.xlu0 %1158
        %1162 = vset.pattern.permute.xlu0 0
        %1163 = vperm.xlu0 %1162, %v1016
        %v1164 = vpop.permute.xlu0 %1163
        %1167 = vset.pattern.permute.xlu0 0
        %1168 = vperm.xlu0 %1167, %v1017
        %v1169 = vpop.permute.xlu0 %1168
        %1172 = vset.pattern.permute.xlu0 0
        %1173 = vperm.xlu0 %1172, %v1018
        %v1174 = vpop.permute.xlu0 %1173
        %1177 = vset.pattern.permute.xlu0 0
        %1178 = vperm.xlu0 %1177, %v1019
        %v1179 = vpop.permute.xlu0 %1178
        %v1182 = vlaneseq
        %v1183 = vshrl.u32 %v1182, 7
        %v1184 = vsub.s32 0, %v1183
        %v1185 = vrot.slane %v1020, %v1184
        %v1186 = vlaneseq
        %v1187 = vshrl.u32 %v1186, 7
        %v1188 = vsub.s32 1, %v1187
        %v1189 = vrot.slane %v1020, %v1188
        %v1190 = vlaneseq
        %v1191 = vshrl.u32 %v1190, 7
        %v1192 = vsub.s32 2, %v1191
        %v1193 = vrot.slane %v1020, %v1192
        %v1194 = vlaneseq
        %v1195 = vshrl.u32 %v1194, 7
        %v1196 = vsub.s32 3, %v1195
        %v1197 = vrot.slane %v1020, %v1196
        %vm1202 = vcmp.ne.f32.partialorder %v1024, %v1185
        %vm1203 = vcmp.ne.f32.partialorder %v1024, %v1189
        %vm1204 = vcmp.ne.f32.partialorder %v1024, %v1193
        %vm1205 = vcmp.ne.f32.partialorder %v1024, %v1197
        %vm1206 = vcmp.ne.f32.partialorder %v1029, %v1185
        %vm1207 = vcmp.ne.f32.partialorder %v1029, %v1189
        %vm1208 = vcmp.ne.f32.partialorder %v1029, %v1193
        %vm1209 = vcmp.ne.f32.partialorder %v1029, %v1197
        %vm1210 = vcmp.ne.f32.partialorder %v1034, %v1185
        %vm1211 = vcmp.ne.f32.partialorder %v1034, %v1189
        %vm1212 = vcmp.ne.f32.partialorder %v1034, %v1193
        %vm1213 = vcmp.ne.f32.partialorder %v1034, %v1197
        %vm1214 = vcmp.ne.f32.partialorder %v1039, %v1185
        %vm1215 = vcmp.ne.f32.partialorder %v1039, %v1189
        %vm1216 = vcmp.ne.f32.partialorder %v1039, %v1193
        %vm1217 = vcmp.ne.f32.partialorder %v1039, %v1197
        %vm1218 = vcmp.ne.f32.partialorder %v1044, %v1185
        %vm1219 = vcmp.ne.f32.partialorder %v1044, %v1189
        %vm1220 = vcmp.ne.f32.partialorder %v1044, %v1193
        %vm1221 = vcmp.ne.f32.partialorder %v1044, %v1197
        %vm1222 = vcmp.ne.f32.partialorder %v1049, %v1185
        %vm1223 = vcmp.ne.f32.partialorder %v1049, %v1189
        %vm1224 = vcmp.ne.f32.partialorder %v1049, %v1193
        %vm1225 = vcmp.ne.f32.partialorder %v1049, %v1197
        %vm1226 = vcmp.ne.f32.partialorder %v1054, %v1185
        %vm1227 = vcmp.ne.f32.partialorder %v1054, %v1189
        %vm1228 = vcmp.ne.f32.partialorder %v1054, %v1193
        %vm1229 = vcmp.ne.f32.partialorder %v1054, %v1197
        %vm1230 = vcmp.ne.f32.partialorder %v1059, %v1185
        %vm1231 = vcmp.ne.f32.partialorder %v1059, %v1189
        %vm1232 = vcmp.ne.f32.partialorder %v1059, %v1193
        %vm1233 = vcmp.ne.f32.partialorder %v1059, %v1197
        %vm1234 = vcmp.ne.f32.partialorder %v1064, %v1185
        %vm1235 = vcmp.ne.f32.partialorder %v1064, %v1189
        %vm1236 = vcmp.ne.f32.partialorder %v1064, %v1193
        %vm1237 = vcmp.ne.f32.partialorder %v1064, %v1197
        %vm1238 = vcmp.ne.f32.partialorder %v1069, %v1185
        %vm1239 = vcmp.ne.f32.partialorder %v1069, %v1189
        %vm1240 = vcmp.ne.f32.partialorder %v1069, %v1193
        %vm1241 = vcmp.ne.f32.partialorder %v1069, %v1197
        %vm1242 = vcmp.ne.f32.partialorder %v1074, %v1185
        %vm1243 = vcmp.ne.f32.partialorder %v1074, %v1189
        %vm1244 = vcmp.ne.f32.partialorder %v1074, %v1193
        %vm1245 = vcmp.ne.f32.partialorder %v1074, %v1197
        %vm1246 = vcmp.ne.f32.partialorder %v1079, %v1185
        %vm1247 = vcmp.ne.f32.partialorder %v1079, %v1189
        %vm1248 = vcmp.ne.f32.partialorder %v1079, %v1193
        %vm1249 = vcmp.ne.f32.partialorder %v1079, %v1197
        %vm1250 = vcmp.ne.f32.partialorder %v1084, %v1185
        %vm1251 = vcmp.ne.f32.partialorder %v1084, %v1189
        %vm1252 = vcmp.ne.f32.partialorder %v1084, %v1193
        %vm1253 = vcmp.ne.f32.partialorder %v1084, %v1197
        %vm1254 = vcmp.ne.f32.partialorder %v1089, %v1185
        %vm1255 = vcmp.ne.f32.partialorder %v1089, %v1189
        %vm1256 = vcmp.ne.f32.partialorder %v1089, %v1193
        %vm1257 = vcmp.ne.f32.partialorder %v1089, %v1197
        %vm1258 = vcmp.ne.f32.partialorder %v1094, %v1185
        %vm1259 = vcmp.ne.f32.partialorder %v1094, %v1189
        %vm1260 = vcmp.ne.f32.partialorder %v1094, %v1193
        %vm1261 = vcmp.ne.f32.partialorder %v1094, %v1197
        %vm1262 = vcmp.ne.f32.partialorder %v1099, %v1185
        %vm1263 = vcmp.ne.f32.partialorder %v1099, %v1189
        %vm1264 = vcmp.ne.f32.partialorder %v1099, %v1193
        %vm1265 = vcmp.ne.f32.partialorder %v1099, %v1197
        %vm1266 = vcmp.ne.f32.partialorder %v1104, %v1185
        %vm1267 = vcmp.ne.f32.partialorder %v1104, %v1189
        %vm1268 = vcmp.ne.f32.partialorder %v1104, %v1193
        %vm1269 = vcmp.ne.f32.partialorder %v1104, %v1197
        %vm1270 = vcmp.ne.f32.partialorder %v1109, %v1185
        %vm1271 = vcmp.ne.f32.partialorder %v1109, %v1189
        %vm1272 = vcmp.ne.f32.partialorder %v1109, %v1193
        %vm1273 = vcmp.ne.f32.partialorder %v1109, %v1197
        %vm1274 = vcmp.ne.f32.partialorder %v1114, %v1185
        %vm1275 = vcmp.ne.f32.partialorder %v1114, %v1189
        %vm1276 = vcmp.ne.f32.partialorder %v1114, %v1193
        %vm1277 = vcmp.ne.f32.partialorder %v1114, %v1197
        %vm1278 = vcmp.ne.f32.partialorder %v1119, %v1185
        %vm1279 = vcmp.ne.f32.partialorder %v1119, %v1189
        %vm1280 = vcmp.ne.f32.partialorder %v1119, %v1193
        %vm1281 = vcmp.ne.f32.partialorder %v1119, %v1197
        %vm1282 = vcmp.ne.f32.partialorder %v1124, %v1185
        %vm1283 = vcmp.ne.f32.partialorder %v1124, %v1189
        %vm1284 = vcmp.ne.f32.partialorder %v1124, %v1193
        %vm1285 = vcmp.ne.f32.partialorder %v1124, %v1197
        %vm1286 = vcmp.ne.f32.partialorder %v1129, %v1185
        %vm1287 = vcmp.ne.f32.partialorder %v1129, %v1189
        %vm1288 = vcmp.ne.f32.partialorder %v1129, %v1193
        %vm1289 = vcmp.ne.f32.partialorder %v1129, %v1197
        %vm1290 = vcmp.ne.f32.partialorder %v1134, %v1185
        %vm1291 = vcmp.ne.f32.partialorder %v1134, %v1189
        %vm1292 = vcmp.ne.f32.partialorder %v1134, %v1193
        %vm1293 = vcmp.ne.f32.partialorder %v1134, %v1197
        %vm1294 = vcmp.ne.f32.partialorder %v1139, %v1185
        %vm1295 = vcmp.ne.f32.partialorder %v1139, %v1189
        %vm1296 = vcmp.ne.f32.partialorder %v1139, %v1193
        %vm1297 = vcmp.ne.f32.partialorder %v1139, %v1197
        %vm1298 = vcmp.ne.f32.partialorder %v1144, %v1185
        %vm1299 = vcmp.ne.f32.partialorder %v1144, %v1189
        %vm1300 = vcmp.ne.f32.partialorder %v1144, %v1193
        %vm1301 = vcmp.ne.f32.partialorder %v1144, %v1197
        %vm1302 = vcmp.ne.f32.partialorder %v1149, %v1185
        %vm1303 = vcmp.ne.f32.partialorder %v1149, %v1189
        %vm1304 = vcmp.ne.f32.partialorder %v1149, %v1193
        %vm1305 = vcmp.ne.f32.partialorder %v1149, %v1197
        %vm1306 = vcmp.ne.f32.partialorder %v1154, %v1185
        %vm1307 = vcmp.ne.f32.partialorder %v1154, %v1189
        %vm1308 = vcmp.ne.f32.partialorder %v1154, %v1193
        %vm1309 = vcmp.ne.f32.partialorder %v1154, %v1197
        %vm1310 = vcmp.ne.f32.partialorder %v1159, %v1185
        %vm1311 = vcmp.ne.f32.partialorder %v1159, %v1189
        %vm1312 = vcmp.ne.f32.partialorder %v1159, %v1193
        %vm1313 = vcmp.ne.f32.partialorder %v1159, %v1197
        %vm1314 = vcmp.ne.f32.partialorder %v1164, %v1185
        %vm1315 = vcmp.ne.f32.partialorder %v1164, %v1189
        %vm1316 = vcmp.ne.f32.partialorder %v1164, %v1193
        %vm1317 = vcmp.ne.f32.partialorder %v1164, %v1197
        %vm1318 = vcmp.ne.f32.partialorder %v1169, %v1185
        %vm1319 = vcmp.ne.f32.partialorder %v1169, %v1189
        %vm1320 = vcmp.ne.f32.partialorder %v1169, %v1193
        %vm1321 = vcmp.ne.f32.partialorder %v1169, %v1197
        %vm1322 = vcmp.ne.f32.partialorder %v1174, %v1185
        %vm1323 = vcmp.ne.f32.partialorder %v1174, %v1189
        %vm1324 = vcmp.ne.f32.partialorder %v1174, %v1193
        %vm1325 = vcmp.ne.f32.partialorder %v1174, %v1197
        %vm1326 = vcmp.ne.f32.partialorder %v1179, %v1185
        %vm1327 = vcmp.ne.f32.partialorder %v1179, %v1189
        %vm1328 = vcmp.ne.f32.partialorder %v1179, %v1193
        %vm1329 = vcmp.ne.f32.partialorder %v1179, %v1197
        %v1330 = vsel %vm1202, %v637, 0.0
        %v1331 = vsel %vm1203, %v639, 0.0
        %v1332 = vsel %vm1204, %v830, 0.0
        %v1333 = vsel %vm1205, %v832, 0.0
        %v1334 = vsel %vm1206, %v641, 0.0
        %v1335 = vsel %vm1207, %v643, 0.0
        %v1336 = vsel %vm1208, %v834, 0.0
        %v1337 = vsel %vm1209, %v836, 0.0
        %v1338 = vsel %vm1210, %v647, 0.0
        %v1339 = vsel %vm1211, %v649, 0.0
        %v1340 = vsel %vm1212, %v840, 0.0
        %v1341 = vsel %vm1213, %v842, 0.0
        %v1342 = vsel %vm1214, %v651, 0.0
        %v1343 = vsel %vm1215, %v653, 0.0
        %v1344 = vsel %vm1216, %v844, 0.0
        %v1345 = vsel %vm1217, %v846, 0.0
        %v1346 = vsel %vm1218, %v657, 0.0
        %v1347 = vsel %vm1219, %v659, 0.0
        %v1348 = vsel %vm1220, %v850, 0.0
        %v1349 = vsel %vm1221, %v852, 0.0
        %v1350 = vsel %vm1222, %v661, 0.0
        %v1351 = vsel %vm1223, %v663, 0.0
        %v1352 = vsel %vm1224, %v854, 0.0
        %v1353 = vsel %vm1225, %v856, 0.0
        %v1354 = vsel %vm1226, %v667, 0.0
        %v1355 = vsel %vm1227, %v669, 0.0
        %v1356 = vsel %vm1228, %v860, 0.0
        %v1357 = vsel %vm1229, %v862, 0.0
        %v1358 = vsel %vm1230, %v671, 0.0
        %v1359 = vsel %vm1231, %v673, 0.0
        %v1360 = vsel %vm1232, %v864, 0.0
        %v1361 = vsel %vm1233, %v866, 0.0
        %v1362 = vsel %vm1234, %v677, 0.0
        %v1363 = vsel %vm1235, %v679, 0.0
        %v1364 = vsel %vm1236, %v870, 0.0
        %v1365 = vsel %vm1237, %v872, 0.0
        %v1366 = vsel %vm1238, %v681, 0.0
        %v1367 = vsel %vm1239, %v683, 0.0
        %v1368 = vsel %vm1240, %v874, 0.0
        %v1369 = vsel %vm1241, %v876, 0.0
        %v1370 = vsel %vm1242, %v687, 0.0
        %v1371 = vsel %vm1243, %v689, 0.0
        %v1372 = vsel %vm1244, %v880, 0.0
        %v1373 = vsel %vm1245, %v882, 0.0
        %v1374 = vsel %vm1246, %v691, 0.0
        %v1375 = vsel %vm1247, %v693, 0.0
        %v1376 = vsel %vm1248, %v884, 0.0
        %v1377 = vsel %vm1249, %v886, 0.0
        %v1378 = vsel %vm1250, %v697, 0.0
        %v1379 = vsel %vm1251, %v699, 0.0
        %v1380 = vsel %vm1252, %v890, 0.0
        %v1381 = vsel %vm1253, %v892, 0.0
        %v1382 = vsel %vm1254, %v701, 0.0
        %v1383 = vsel %vm1255, %v703, 0.0
        %v1384 = vsel %vm1256, %v894, 0.0
        %v1385 = vsel %vm1257, %v896, 0.0
        %v1386 = vsel %vm1258, %v707, 0.0
        %v1387 = vsel %vm1259, %v709, 0.0
        %v1388 = vsel %vm1260, %v900, 0.0
        %v1389 = vsel %vm1261, %v902, 0.0
        %v1390 = vsel %vm1262, %v711, 0.0
        %v1391 = vsel %vm1263, %v713, 0.0
        %v1392 = vsel %vm1264, %v904, 0.0
        %v1393 = vsel %vm1265, %v906, 0.0
        %v1394 = vsel %vm1266, %v717, 0.0
        %v1395 = vsel %vm1267, %v719, 0.0
        %v1396 = vsel %vm1268, %v910, 0.0
        %v1397 = vsel %vm1269, %v912, 0.0
        %v1398 = vsel %vm1270, %v721, 0.0
        %v1399 = vsel %vm1271, %v723, 0.0
        %v1400 = vsel %vm1272, %v914, 0.0
        %v1401 = vsel %vm1273, %v916, 0.0
        %v1402 = vsel %vm1274, %v727, 0.0
        %v1403 = vsel %vm1275, %v729, 0.0
        %v1404 = vsel %vm1276, %v920, 0.0
        %v1405 = vsel %vm1277, %v922, 0.0
        %v1406 = vsel %vm1278, %v731, 0.0
        %v1407 = vsel %vm1279, %v733, 0.0
        %v1408 = vsel %vm1280, %v924, 0.0
        %v1409 = vsel %vm1281, %v926, 0.0
        %v1410 = vsel %vm1282, %v737, 0.0
        %v1411 = vsel %vm1283, %v739, 0.0
        %v1412 = vsel %vm1284, %v930, 0.0
        %v1413 = vsel %vm1285, %v932, 0.0
        %v1414 = vsel %vm1286, %v741, 0.0
        %v1415 = vsel %vm1287, %v743, 0.0
        %v1416 = vsel %vm1288, %v934, 0.0
        %v1417 = vsel %vm1289, %v936, 0.0
        %v1418 = vsel %vm1290, %v747, 0.0
        %v1419 = vsel %vm1291, %v749, 0.0
        %v1420 = vsel %vm1292, %v940, 0.0
        %v1421 = vsel %vm1293, %v942, 0.0
        %v1422 = vsel %vm1294, %v751, 0.0
        %v1423 = vsel %vm1295, %v753, 0.0
        %v1424 = vsel %vm1296, %v944, 0.0
        %v1425 = vsel %vm1297, %v946, 0.0
        %v1426 = vsel %vm1298, %v757, 0.0
        %v1427 = vsel %vm1299, %v759, 0.0
        %v1428 = vsel %vm1300, %v950, 0.0
        %v1429 = vsel %vm1301, %v952, 0.0
        %v1430 = vsel %vm1302, %v761, 0.0
        %v1431 = vsel %vm1303, %v763, 0.0
        %v1432 = vsel %vm1304, %v954, 0.0
        %v1433 = vsel %vm1305, %v956, 0.0
        %v1434 = vsel %vm1306, %v767, 0.0
        %v1435 = vsel %vm1307, %v769, 0.0
        %v1436 = vsel %vm1308, %v960, 0.0
        %v1437 = vsel %vm1309, %v962, 0.0
        %v1438 = vsel %vm1310, %v771, 0.0
        %v1439 = vsel %vm1311, %v773, 0.0
        %v1440 = vsel %vm1312, %v964, 0.0
        %v1441 = vsel %vm1313, %v966, 0.0
        %v1442 = vsel %vm1314, %v777, 0.0
        %v1443 = vsel %vm1315, %v779, 0.0
        %v1444 = vsel %vm1316, %v970, 0.0
        %v1445 = vsel %vm1317, %v972, 0.0
        %v1446 = vsel %vm1318, %v781, 0.0
        %v1447 = vsel %vm1319, %v783, 0.0
        %v1448 = vsel %vm1320, %v974, 0.0
        %v1449 = vsel %vm1321, %v976, 0.0
        %v1450 = vsel %vm1322, %v787, 0.0
        %v1451 = vsel %vm1323, %v789, 0.0
        %v1452 = vsel %vm1324, %v980, 0.0
        %v1453 = vsel %vm1325, %v982, 0.0
        %v1454 = vsel %vm1326, %v791, 0.0
        %v1455 = vsel %vm1327, %v793, 0.0
        %v1456 = vsel %vm1328, %v984, 0.0
        %v1457 = vsel %vm1329, %v986, 0.0
        %v1458 = vadd.f32 %v1330, %v1334
        %v1459 = vadd.f32 %v1331, %v1335
        %v1460 = vadd.f32 %v1332, %v1336
        %v1461 = vadd.f32 %v1333, %v1337
        %v1462 = vadd.f32 %v1458, %v1338
        %v1463 = vadd.f32 %v1459, %v1339
        %v1464 = vadd.f32 %v1460, %v1340
        %v1465 = vadd.f32 %v1461, %v1341
        %v1466 = vadd.f32 %v1462, %v1342
        %v1467 = vadd.f32 %v1463, %v1343
        %v1468 = vadd.f32 %v1464, %v1344
        %v1469 = vadd.f32 %v1465, %v1345
        %v1470 = vadd.f32 %v1466, %v1346
        %v1471 = vadd.f32 %v1467, %v1347
        %v1472 = vadd.f32 %v1468, %v1348
        %v1473 = vadd.f32 %v1469, %v1349
        %v1474 = vadd.f32 %v1470, %v1350
        %v1475 = vadd.f32 %v1471, %v1351
        %v1476 = vadd.f32 %v1472, %v1352
        %v1477 = vadd.f32 %v1473, %v1353
        %v1478 = vadd.f32 %v1474, %v1354
        %v1479 = vadd.f32 %v1475, %v1355
        %v1480 = vadd.f32 %v1476, %v1356
        %v1481 = vadd.f32 %v1477, %v1357
        %v1482 = vadd.f32 %v1478, %v1358
        %v1483 = vadd.f32 %v1479, %v1359
        %v1484 = vadd.f32 %v1480, %v1360
        %v1485 = vadd.f32 %v1481, %v1361
        %v1486 = vadd.f32 %v1482, %v1362
        %v1487 = vadd.f32 %v1483, %v1363
        %v1488 = vadd.f32 %v1484, %v1364
        %v1489 = vadd.f32 %v1485, %v1365
        %v1490 = vadd.f32 %v1486, %v1366
        %v1491 = vadd.f32 %v1487, %v1367
        %v1492 = vadd.f32 %v1488, %v1368
        %v1493 = vadd.f32 %v1489, %v1369
        %v1494 = vadd.f32 %v1490, %v1370
        %v1495 = vadd.f32 %v1491, %v1371
        %v1496 = vadd.f32 %v1492, %v1372
        %v1497 = vadd.f32 %v1493, %v1373
        %v1498 = vadd.f32 %v1494, %v1374
        %v1499 = vadd.f32 %v1495, %v1375
        %v1500 = vadd.f32 %v1496, %v1376
        %v1501 = vadd.f32 %v1497, %v1377
        %v1502 = vadd.f32 %v1498, %v1378
        %v1503 = vadd.f32 %v1499, %v1379
        %v1504 = vadd.f32 %v1500, %v1380
        %v1505 = vadd.f32 %v1501, %v1381
        %v1506 = vadd.f32 %v1502, %v1382
        %v1507 = vadd.f32 %v1503, %v1383
        %v1508 = vadd.f32 %v1504, %v1384
        %v1509 = vadd.f32 %v1505, %v1385
        %v1510 = vadd.f32 %v1506, %v1386
        %v1511 = vadd.f32 %v1507, %v1387
        %v1512 = vadd.f32 %v1508, %v1388
        %v1513 = vadd.f32 %v1509, %v1389
        %v1514 = vadd.f32 %v1510, %v1390
        %v1515 = vadd.f32 %v1511, %v1391
        %v1516 = vadd.f32 %v1512, %v1392
        %v1517 = vadd.f32 %v1513, %v1393
        %v1518 = vadd.f32 %v1514, %v1394
        %v1519 = vadd.f32 %v1515, %v1395
        %v1520 = vadd.f32 %v1516, %v1396
        %v1521 = vadd.f32 %v1517, %v1397
        %v1522 = vadd.f32 %v1518, %v1398
        %v1523 = vadd.f32 %v1519, %v1399
        %v1524 = vadd.f32 %v1520, %v1400
        %v1525 = vadd.f32 %v1521, %v1401
        %v1526 = vadd.f32 %v1522, %v1402
        %v1527 = vadd.f32 %v1523, %v1403
        %v1528 = vadd.f32 %v1524, %v1404
        %v1529 = vadd.f32 %v1525, %v1405
        %v1530 = vadd.f32 %v1526, %v1406
        %v1531 = vadd.f32 %v1527, %v1407
        %v1532 = vadd.f32 %v1528, %v1408
        %v1533 = vadd.f32 %v1529, %v1409
        %v1534 = vadd.f32 %v1530, %v1410
        %v1535 = vadd.f32 %v1531, %v1411
        %v1536 = vadd.f32 %v1532, %v1412
        %v1537 = vadd.f32 %v1533, %v1413
        %v1538 = vadd.f32 %v1534, %v1414
        %v1539 = vadd.f32 %v1535, %v1415
        %v1540 = vadd.f32 %v1536, %v1416
        %v1541 = vadd.f32 %v1537, %v1417
        %v1542 = vadd.f32 %v1538, %v1418
        %v1543 = vadd.f32 %v1539, %v1419
        %v1544 = vadd.f32 %v1540, %v1420
        %v1545 = vadd.f32 %v1541, %v1421
        %v1546 = vadd.f32 %v1542, %v1422
        %v1547 = vadd.f32 %v1543, %v1423
        %v1548 = vadd.f32 %v1544, %v1424
        %v1549 = vadd.f32 %v1545, %v1425
        %v1550 = vadd.f32 %v1546, %v1426
        %v1551 = vadd.f32 %v1547, %v1427
        %v1552 = vadd.f32 %v1548, %v1428
        %v1553 = vadd.f32 %v1549, %v1429
        %v1554 = vadd.f32 %v1550, %v1430
        %v1555 = vadd.f32 %v1551, %v1431
        %v1556 = vadd.f32 %v1552, %v1432
        %v1557 = vadd.f32 %v1553, %v1433
        %v1558 = vadd.f32 %v1554, %v1434
        %v1559 = vadd.f32 %v1555, %v1435
        %v1560 = vadd.f32 %v1556, %v1436
        %v1561 = vadd.f32 %v1557, %v1437
        %v1562 = vadd.f32 %v1558, %v1438
        %v1563 = vadd.f32 %v1559, %v1439
        %v1564 = vadd.f32 %v1560, %v1440
        %v1565 = vadd.f32 %v1561, %v1441
        %v1566 = vadd.f32 %v1562, %v1442
        %v1567 = vadd.f32 %v1563, %v1443
        %v1568 = vadd.f32 %v1564, %v1444
        %v1569 = vadd.f32 %v1565, %v1445
        %v1570 = vadd.f32 %v1566, %v1446
        %v1571 = vadd.f32 %v1567, %v1447
        %v1572 = vadd.f32 %v1568, %v1448
        %v1573 = vadd.f32 %v1569, %v1449
        %v1574 = vadd.f32 %v1570, %v1450
        %v1575 = vadd.f32 %v1571, %v1451
        %v1576 = vadd.f32 %v1572, %v1452
        %v1577 = vadd.f32 %v1573, %v1453
        %v1578 = vadd.f32 %v1574, %v1454
        %v1579 = vadd.f32 %v1575, %v1455
        %v1580 = vadd.f32 %v1576, %v1456
        %v1581 = vadd.f32 %v1577, %v1457
        %v1582 = vld [vmem:[%s249] sm:$0xff]
        %v1583 = vld [vmem:[%s249 + $0x8] sm:$0xff]
        %v1584 = vld [vmem:[%s249 + $0x10] sm:$0xff]
        %v1585 = vld [vmem:[%s249 + $0x18] sm:$0xff]
        %v1586 = vadd.f32 %v1582, %v1578
        %v1587 = vadd.f32 %v1583, %v1579
        %v1588 = vadd.f32 %v1584, %v1580
        %v1589 = vadd.f32 %v1585, %v1581
        %1590 = vst [vmem:[%s249] sm:$0xff] %v1586
        %1591 = vst [vmem:[%s249 + $0x8] sm:$0xff] %v1587
        %1592 = vst [vmem:[%s249 + $0x10] sm:$0xff] %v1588
        %1593 = vst [vmem:[%s249 + $0x18] sm:$0xff] %v1589
        %s1594 = sand.u32 %s142, 1
        %s1595 = scalar_lea.sflag [#allocation3], %s1594
        %s1596 = sand.u32 %s142, 1
        %s1597 = smul.addr %s1596, 32
        %s1598 = scalar_lea.vmem [#allocation2], %s1597
        // Predicated region
        $region41: #{tpu_custom_call.1} parent=35 // pred_check
          %p1599 = pneg %p152
        $region42: #{tpu_custom_call.1} parent=35 // pred_check_branch
          %1601 = sbr.rel (%p1599) target = $region44
        $region43: #{tpu_custom_call.1} parent=35 // pred_region
          %s1603 = ssub.s32 512, 512
          %1604 = vsyncadd %s1595, %s1603
          %s1605 = smul.addr %s22, 4
          %s1606 = smul.addr %s1605, 128
          %s1607 = scalar_lea.hbm %s4, %s1606
          %s1609 = sshll.u32 %s1598, 4
          %s1610 = int_to_ptr.vmem [resolvable:$true] %s1609
          %1612 = dma.vmem_to_hbm [thread:$0]  %s1610, 512, %s1607, %s1595
        $region44: #{tpu_custom_call.1} parent=35 // pred_fallthru
          _
      $region36: #{tpu_custom_call.1} parent=5 // pred_fallthru
        _
      %p1613 = scmp.le.s32.totalorder 2, %s13
      // Predicated region
      $region45: #{tpu_custom_call.1} parent=5 // pred_check
        %p1614 = pneg %p1613
      $region46: #{tpu_custom_call.1} parent=5 // pred_check_branch
        %1616 = sbr.rel (%p1614) target = $region48
      $region47: #{tpu_custom_call.1} parent=5 // pred_region
        %s1617 = ssub.s32 %s13, 2
        // Predicated region
        $region49: #{tpu_custom_call.1} parent=47 // pred_check
          %p1618 = pneg %p158
        $region50: #{tpu_custom_call.1} parent=47 // pred_check_branch
          %1620 = sbr.rel (%p1618) target = $region52
        $region51: #{tpu_custom_call.1} parent=47 // pred_region
          %s1621 = sand.u32 %s143, 1
          %s1622 = scalar_lea.sflag [#allocation3], %s1621
          %s1623 = sand.u32 %s143, 1
          %s1624 = smul.addr %s1623, 32
          %s1625 = scalar_lea.vmem [#allocation2], %s1624
          %1626 = dma.done %s1622, 512
        $region52: #{tpu_custom_call.1} parent=47 // pred_fallthru
          _
      $region48: #{tpu_custom_call.1} parent=5 // pred_fallthru
        _
    $region6: #{tpu_custom_call.1} parent=1 // loop_footer
      %s17 = sadd.s32 1, %s13
    $region7: #{tpu_custom_call.1} parent=1 // loop_footer_branch
      %12 = sbr.rel target = $region3
    $region8: #{tpu_custom_call.1} parent=1 // loop_exit
      _
    %1627 = vsyncpa [#allocation3], 1
    %s1628 = scalar_lea.sflag [#allocation3], 1
    %1629 = vsyncpa %s1628, 1

</llo_original>
